<compile_context>
chip_gen: v7x
topology: tpu7x:2x2x1
jax: 0.10.0
libtpu: 0.0.40
codegen_flags: <defaults>
</compile_context>

<pallas_src>
import functools
import math

import jax
import jax.numpy as jnp
from jax.experimental import pallas as pl
from jax.experimental.pallas import tpu as pltpu

# ----------------------------- configuration -----------------------------
C_IN = 3           # input channels (RGB)
C_FEAT = 32        # backbone feature channels
NUM_SCENES = 27
NUM_LABELS = 20
NUM_ANCHORS = 4    # anchors per feature-map cell

LOC_CH = 4 * NUM_ANCHORS             # 16
CONF_CH = NUM_LABELS * NUM_ANCHORS   # 80
DN_OFF = LOC_CH + CONF_CH            # depth/normals packed at lanes 96..99
SCENE_PAD = 128                      # lane-dense scene output
DET_OUT_PAD = 128                    # lane-dense detection output


def _round_up(a, b):
    return (a + b - 1) // b * b


# ------------------------------ Pallas kernel ------------------------------
def _network_kernel(p_ref, wsm_ref, bsm_ref, wdet_ref, bdet_ref,
                    det_ref, sc_ref, gap_ref, fm_ref,
                    *, hw, hf, wf, tile_rows, det_rows, hw_pad, inv_hw):
    """Whole forward pass for one (image, pixel-row-tile) grid point.

    Per tile  : backbone GEMM+ReLU, residual 1x1 refinement (fused res+ReLU),
                refined features stashed into a halo-padded VMEM feature map,
                masked GAP accumulation.
    Last tile : scene head from the pooled features, and the fused
                loc+conf+depth+normals head as ONE (Hf*Wf, 288)@(288, 128)
                MXU GEMM over an in-register im2col of the VMEM feature map.
    """
    C = C_FEAT
    t = pl.program_id(1)
    rpt = tile_rows // wf                       # feature-map rows per tile

    @pl.when(t == 0)
    def _init():
        gap_ref[...] = jnp.zeros_like(gap_ref)
        fm_ref[...] = jnp.zeros_like(fm_ref)    # zero incl. halo border

    # ---- backbone: 3x3/s2 conv as im2col GEMM + bias + ReLU (f32 accum) ----
    x = p_ref[0]                                              # (TR, Kpad) bf16
    feat = jnp.dot(x, wsm_ref[:, 0:C], preferred_element_type=jnp.float32)
    feat = jnp.maximum(feat + bsm_ref[:, 0:C], 0.0)           # (TR, C) f32

    # ---- auxiliary: residual 1x1 refinement, fused residual + ReLU ----
    fr = jnp.dot(feat.astype(jnp.bfloat16), wsm_ref[:, C:2 * C],
                 preferred_element_type=jnp.float32)
    fr = jnp.maximum(fr + bsm_ref[:, C:2 * C] + feat, 0.0)    # (TR, C) f32

    # stash refined features into the halo-padded VMEM feature map (bf16)
    fm_ref[pl.ds(1 + t * rpt, rpt), 1:1 + wf, :] = (
        fr.astype(jnp.bfloat16).reshape(rpt, wf, C))

    # masked global-average-pool accumulation (ignore rows past real H*W)
    row0 = t * tile_rows
    ridx = jax.lax.broadcasted_iota(jnp.int32, (tile_rows, 1), 0) + row0
    gap_ref[...] += jnp.sum(jnp.where(ridx < hw, fr, 0.0), axis=0,
                            keepdims=True)

    @pl.when(t == pl.num_programs(1) - 1)
    def _finalize():
        # ---- scene head: GAP -> linear (real lanes 0..NUM_SCENES-1) ----
        pooled = (gap_ref[...] * inv_hw).astype(jnp.bfloat16)     # (1, C)
        scene = jnp.dot(pooled, wsm_ref[:, 2 * C:],
                        preferred_element_type=jnp.float32)
        sc_ref[0] = scene + bsm_ref[:, 2 * C:]

        # ---- fused detection + depth/normals: single K = 9*C GEMM ----
        if hw_pad > hw:
            # padded pixel rows wrote garbage below row hf; re-zero the halo
            fm_ref[1 + hf] = jnp.zeros((wf + 2, C), jnp.bfloat16)
        fmv = fm_ref[...]                                     # (rows, wf+2, C)
        cols = []
        for di in range(3):
            for dj in range(3):
                cols.append(fmv[di:di + hf, dj:dj + wf, :].reshape(hf * wf, C))
        colmat = jnp.concatenate(cols, axis=-1)               # (hw, 9*C) bf16
        out = jnp.dot(colmat, wdet_ref[...],
                      preferred_element_type=jnp.float32) + bdet_ref[...]
        if det_rows > hw:
            out = jnp.concatenate(
                [out, jnp.zeros((det_rows - hw, out.shape[-1]), out.dtype)],
                axis=0)
        det_ref[0] = out


# ------------------------------ plain-JAX glue -----------------------------
def im2col(x_nhwc, kh, kw, stride, pad):
    """im2col lowering of a conv: (N*Ho*Wo, kh*kw*C) patch matrix."""
    x = jnp.pad(x_nhwc, ((0, 0), (pad, pad), (pad, pad), (0, 0)))
    n, hp, wp, c = x.shape
    ho = (hp - kh) // stride + 1
    wo = (wp - kw) // stride + 1
    cols = []
    for i in range(kh):
        for j in range(kw):
            cols.append(x[:, i:i + stride * ho:stride,
                          j:j + stride * wo:stride, :])
    patches = jnp.concatenate(cols, axis=-1)            # (N, Ho, Wo, kh*kw*C)
    return patches.reshape(n * ho * wo, kh * kw * c), ho, wo


def init_params(key):
    """Deterministic synthetic parameter init (weights in im2col/GEMM layout)."""
    keys = jax.random.split(key, 14)
    s = 0.05

    def w(k, shape):
        return (s * jax.random.normal(k, shape)).astype(jnp.float32)

    return {
        "w_bb": w(keys[0], (3 * 3 * C_IN, C_FEAT)),   # backbone 3x3 s2 conv
        "b_bb": w(keys[1], (C_FEAT,)),
        "w_ref": w(keys[2], (C_FEAT, C_FEAT)),        # auxiliary 1x1 refinement
        "b_ref": w(keys[3], (C_FEAT,)),
        "w_sc": w(keys[4], (C_FEAT, NUM_SCENES)),     # scene head
        "b_sc": w(keys[5], (NUM_SCENES,)),
        "w_d": w(keys[6], (C_FEAT, 1)),               # depth 1x1 head
        "b_d": w(keys[7], (1,)),
        "w_n": w(keys[8], (C_FEAT, 3)),               # normals 1x1 head
        "b_n": w(keys[9], (3,)),
        "w_loc": w(keys[10], (3 * 3 * C_FEAT, LOC_CH)),    # loc 3x3 conv
        "b_loc": w(keys[11], (LOC_CH,)),
        "w_cnf": w(keys[12], (3 * 3 * C_FEAT, CONF_CH)),   # conf 3x3 conv
        "b_cnf": w(keys[13], (CONF_CH,)),
    }


def network_forward(x_nchw, params):
    """Forward pass of Network(backbone, detection, auxiliary).

    Input : x (N, 3, H, W)  — NCHW, like PyTorch.
    Output: (locs, confs, scene, depth, normals)
    """
    n = x_nchw.shape[0]
    x = jnp.transpose(x_nchw, (0, 2, 3, 1)).astype(jnp.float32)      # NHWC

    # ---- backbone im2col (plain-JAX layout glue) ----
    patches, hf, wf = im2col(x, 3, 3, stride=2, pad=1)               # (N*HW, 27)
    hw = hf * wf
    k_bb = patches.shape[-1]
    k_pad = _round_up(k_bb, 8)                                       # 27 -> 32
    assert k_pad == C_FEAT, "synthetic config assumes 3x3x3 backbone taps"

    # pixel-row tiling: one big tile when the image fits (overhead-bound
    # regime); tiles are multiples of lcm(8, Wf) so each tile maps to whole
    # feature-map rows of the in-VMEM halo layout.
    m = 8 * wf // math.gcd(8, wf)
    tile_rows = min(_round_up(hw, m), _round_up(4096, m))
    hw_pad = _round_up(hw, tile_rows)
    num_t = hw_pad // tile_rows
    det_rows = _round_up(hw, 8)

    patches = patches.reshape(n, hw, k_bb)
    patches = jnp.pad(patches, ((0, 0), (0, hw_pad - hw), (0, k_pad - k_bb)))
    patches = patches.astype(jnp.bfloat16)

    # ---- weight packing: one bf16 weight slab + one f32 bias slab for the
    #      small heads, plus the fused detection(+depth/normals) weight ----
    C = C_FEAT
    w_bb = jnp.pad(params["w_bb"], ((0, k_pad - k_bb), (0, 0)))
    w_sc = jnp.pad(params["w_sc"], ((0, 0), (0, SCENE_PAD - NUM_SCENES)))
    w_small = jnp.concatenate([w_bb, params["w_ref"], w_sc],
                              axis=1).astype(jnp.bfloat16)           # (32, 192)
    b_small = jnp.concatenate(
        [params["b_bb"], params["b_ref"],
         jnp.pad(params["b_sc"], (0, SCENE_PAD - NUM_SCENES))]).reshape(1, -1)

    kdet = 9 * C
    ctr = 4 * C                              # centre tap rows of the 3x3 im2col
    w_det = jnp.zeros((kdet, DET_OUT_PAD), jnp.float32)
    w_det = w_det.at[:, 0:LOC_CH].set(params["w_loc"])
    w_det = w_det.at[:, LOC_CH:DN_OFF].set(params["w_cnf"])
    w_dn = jnp.concatenate([params["w_d"], params["w_n"]], axis=1)   # (32, 4)
    w_det = w_det.at[ctr:ctr + C, DN_OFF:DN_OFF + 4].set(w_dn)
    w_det = w_det.astype(jnp.bfloat16)
    b_det = jnp.zeros((1, DET_OUT_PAD), jnp.float32)
    b_det = b_det.at[0, 0:LOC_CH].set(params["b_loc"])
    b_det = b_det.at[0, LOC_CH:DN_OFF].set(params["b_cnf"])
    b_det = b_det.at[0, DN_OFF:DN_OFF + 4].set(
        jnp.concatenate([params["b_d"], params["b_n"]]))

    fm_rows = max(hf, hw_pad // wf) + 2

    kern = functools.partial(
        _network_kernel, hw=hw, hf=hf, wf=wf, tile_rows=tile_rows,
        det_rows=det_rows, hw_pad=hw_pad, inv_hw=float(1.0 / hw))

    det, scene_p = pl.pallas_call(
        kern,
        grid=(n, num_t),
        in_specs=[
            pl.BlockSpec((1, tile_rows, k_pad), lambda i, t: (i, t, 0)),
            pl.BlockSpec(w_small.shape, lambda i, t: (0, 0)),
            pl.BlockSpec(b_small.shape, lambda i, t: (0, 0)),
            pl.BlockSpec(w_det.shape, lambda i, t: (0, 0)),
            pl.BlockSpec(b_det.shape, lambda i, t: (0, 0)),
        ],
        out_specs=[
            pl.BlockSpec((1, det_rows, DET_OUT_PAD), lambda i, t: (i, 0, 0)),
            pl.BlockSpec((1, 1, SCENE_PAD), lambda i, t: (i, 0, 0)),
        ],
        out_shape=[
            jax.ShapeDtypeStruct((n, det_rows, DET_OUT_PAD), jnp.float32),
            jax.ShapeDtypeStruct((n, 1, SCENE_PAD), jnp.float32),
        ],
        scratch_shapes=[
            pltpu.VMEM((1, C), jnp.float32),                  # GAP accumulator
            pltpu.VMEM((fm_rows, wf + 2, C), jnp.bfloat16),   # padded feat map
        ],
        compiler_params=pltpu.CompilerParams(
            dimension_semantics=("parallel", "arbitrary"),
            vmem_limit_bytes=32 * 1024 * 1024),
    )(patches, w_small, b_small, w_det, b_det)

    # ---- unpack the lane-dense 128-wide detection slab ----
    det = det[:, :hw, :].reshape(n, hf, wf, DET_OUT_PAD)
    loc = jnp.transpose(det[..., 0:LOC_CH], (0, 3, 1, 2))            # NCHW
    cnf = jnp.transpose(det[..., LOC_CH:DN_OFF], (0, 3, 1, 2))
    locs = loc.reshape(n, 4, -1)
    confs = cnf.reshape(n, NUM_LABELS, -1)
    depth = jnp.transpose(det[..., DN_OFF:DN_OFF + 1], (0, 3, 1, 2))
    normals = jnp.transpose(det[..., DN_OFF + 1:DN_OFF + 4], (0, 3, 1, 2))
    scene = scene_p[:, 0, :NUM_SCENES]
    return locs, confs, scene, depth, normals


def network_reference(x_nchw, params):
    """Pure-JAX f32 reference of the same synthetic Network (for validation)."""
    n = x_nchw.shape[0]
    x = jnp.transpose(x_nchw, (0, 2, 3, 1)).astype(jnp.float32)
    patches, hf, wf = im2col(x, 3, 3, stride=2, pad=1)
    hw = hf * wf
    feat = jnp.maximum(patches @ params["w_bb"] + params["b_bb"], 0.0)
    fr = jnp.maximum(feat @ params["w_ref"] + params["b_ref"] + feat, 0.0)
    scene = (fr.reshape(n, hw, C_FEAT).mean(axis=1) @ params["w_sc"]
             + params["b_sc"])
    dn = jnp.concatenate([fr @ params["w_d"] + params["b_d"],
                          fr @ params["w_n"] + params["b_n"]], axis=-1)
    dn = dn.reshape(n, hf, wf, 4)
    depth = jnp.transpose(dn[..., 0:1], (0, 3, 1, 2))
    normals = jnp.transpose(dn[..., 1:4], (0, 3, 1, 2))
    fr_img = fr.reshape(n, hf, wf, C_FEAT)
    p2, _, _ = im2col(fr_img, 3, 3, stride=1, pad=1)
    loc = (p2 @ params["w_loc"] + params["b_loc"]).reshape(n, hf, wf, -1)
    cnf = (p2 @ params["w_cnf"] + params["b_cnf"]).reshape(n, hf, wf, -1)
    locs = jnp.transpose(loc, (0, 3, 1, 2)).reshape(n, 4, -1)
    confs = jnp.transpose(cnf, (0, 3, 1, 2)).reshape(n, NUM_LABELS, -1)
    return locs, confs, scene, depth, normals


# ---------------------------------- main -----------------------------------
if __name__ == "__main__":
    key = jax.random.PRNGKey(0)
    k_x, k_p = jax.random.split(key)

    # small ROCK-like input: (N, 3, H, W) = (2, 3, 16, 16) -> feature map 8x8
    x = jax.random.normal(k_x, (2, C_IN, 16, 16), dtype=jnp.float32)
    params = init_params(k_p)

    outs = jax.jit(network_forward)(x, params)
    outs = jax.block_until_ready(outs)

    locs, confs, scene, depth, normals = outs
    num_priors = NUM_ANCHORS * 8 * 8
    assert locs.shape == (2, 4, num_priors)
    assert confs.shape == (2, NUM_LABELS, num_priors)
    assert scene.shape == (2, NUM_SCENES)
    assert depth.shape == (2, 1, 8, 8)
    assert normals.shape == (2, 3, 8, 8)

    # validate against the pure-JAX f32 reference (bf16 MXU operands -> loose tol)
    refs = network_reference(x, params)
    for got, want in zip(outs, refs):
        assert got.shape == want.shape
        assert bool(jnp.all(jnp.isfinite(got)))
        assert bool(jnp.allclose(got.astype(jnp.float32), want,
                                 rtol=5e-2, atol=5e-2))

    print("KERNEL_OK")
</pallas_src>

<mosaic_0001>
module attributes {stable_mosaic.version = 11 : i64} {
  func.func @_network_kernel(%arg0: i32, %arg1: i32, %arg2: memref<1x64x32xbf16, #tpu.memory_space<vmem>>, %arg3: memref<32x192xbf16, #tpu.memory_space<vmem>>, %arg4: memref<1x192xf32, #tpu.memory_space<vmem>>, %arg5: memref<288x128xbf16, #tpu.memory_space<vmem>>, %arg6: memref<1x128xf32, #tpu.memory_space<vmem>>, %arg7: memref<1x64x128xf32, #tpu.memory_space<vmem>>, %arg8: memref<1x1x128xf32, #tpu.memory_space<vmem>>, %arg9: memref<1x32xf32, #tpu.memory_space<vmem>>, %arg10: memref<10x10x32xbf16, #tpu.memory_space<vmem>>) attributes {dimension_semantics = [#tpu.dimension_semantics<parallel>, #tpu.dimension_semantics<arbitrary>], iteration_bounds = array<i64: 2, 1>, scalar_prefetch = 0 : i64, scratch_operands = 2 : i64, tpu.core_type = #tpu.core_type<tc>, window_params = [{transform_indices = @transform_0, window_bounds = array<i64: 1, 64, 32>}, {pipeline_mode = #tpu.pipeline_mode<synchronous>, transform_indices = @transform_1, window_bounds = array<i64: 32, 192>}, {pipeline_mode = #tpu.pipeline_mode<synchronous>, transform_indices = @transform_2, window_bounds = array<i64: 1, 192>}, {pipeline_mode = #tpu.pipeline_mode<synchronous>, transform_indices = @transform_3, window_bounds = array<i64: 288, 128>}, {pipeline_mode = #tpu.pipeline_mode<synchronous>, transform_indices = @transform_4, window_bounds = array<i64: 1, 128>}, {transform_indices = @transform_5, window_bounds = array<i64: 1, 64, 128>}, {transform_indices = @transform_6, window_bounds = array<i64: 1, 1, 128>}]} {
    %c0_i32 = arith.constant 0 : i32
    %0 = arith.cmpi eq, %arg1, %c0_i32 : i32
    %1 = arith.extui %0 : i1 to i32
    %c0_i32_0 = arith.constant 0 : i32
    %2 = arith.cmpi ne, %1, %c0_i32_0 : i32
    scf.if %2 {
      %cst_23 = arith.constant 0.000000e+00 : f32
      %45 = vector.broadcast %cst_23 : f32 to vector<1x32xf32>
      %c0_24 = arith.constant 0 : index
      %c0_25 = arith.constant 0 : index
      %46 = vector.load %arg9[%c0_24, %c0_25] : memref<1x32xf32, #tpu.memory_space<vmem>>, vector<1x32xf32>
      tpu.vector_store %arg9[%c0_24, %c0_25], %45 {strides = array<i32>} : memref<1x32xf32, #tpu.memory_space<vmem>>, vector<1x32xf32>,
      %cst_26 = arith.constant 0.000000e+00 : bf16
      %47 = vector.broadcast %cst_26 : bf16 to vector<10x10x32xbf16>
      %c0_27 = arith.constant 0 : index
      %c0_28 = arith.constant 0 : index
      %c0_29 = arith.constant 0 : index
      %48 = vector.load %arg10[%c0_27, %c0_28, %c0_29] : memref<10x10x32xbf16, #tpu.memory_space<vmem>>, vector<10x10x32xbf16>
      tpu.vector_store %arg10[%c0_27, %c0_28, %c0_29], %47 {strides = array<i32>} : memref<10x10x32xbf16, #tpu.memory_space<vmem>>, vector<10x10x32xbf16>,
    } else {
    }
    %c0 = arith.constant 0 : index
    %c0_1 = arith.constant 0 : index
    %c0_2 = arith.constant 0 : index
    %3 = vector.load %arg2[%c0, %c0_1, %c0_2] : memref<1x64x32xbf16, #tpu.memory_space<vmem>>, vector<1x64x32xbf16>
    %4 = vector.shape_cast %3 : vector<1x64x32xbf16> to vector<64x32xbf16>
    %c0_3 = arith.constant 0 : index
    %c0_4 = arith.constant 0 : index
    %5 = vector.load %arg3[%c0_3, %c0_4] : memref<32x192xbf16, #tpu.memory_space<vmem>>, vector<32x32xbf16>
    %cst = arith.constant dense<0.000000e+00> : vector<64x32xf32>
    %6 = tpu.matmul %4, %5, %cst {dimension_numbers = #tpu.dot_dimension_numbers<[1], [0], [0], [1], [0, 0, 1, 1], [], []>} : vector<64x32xbf16>, vector<32x32xbf16>, vector<64x32xf32> -> vector<64x32xf32>
    %c0_5 = arith.constant 0 : index
    %c0_6 = arith.constant 0 : index
    %7 = vector.load %arg4[%c0_5, %c0_6] : memref<1x192xf32, #tpu.memory_space<vmem>>, vector<1x32xf32>
    %8 = vector.broadcast %7 : vector<1x32xf32> to vector<64x32xf32>
    %9 = arith.addf %6, %8 : vector<64x32xf32>
    %cst_7 = arith.constant 0.000000e+00 : f32
    %10 = vector.broadcast %cst_7 : f32 to vector<64x32xf32>
    %11 = arith.maximumf %9, %10 : vector<64x32xf32>
    %12 = arith.truncf %11 : vector<64x32xf32> to vector<64x32xbf16>
    %c0_8 = arith.constant 0 : index
    %c32 = arith.constant 32 : index
    %13 = vector.load %arg3[%c0_8, %c32] : memref<32x192xbf16, #tpu.memory_space<vmem>>, vector<32x32xbf16>
    %cst_9 = arith.constant dense<0.000000e+00> : vector<64x32xf32>
    %14 = tpu.matmul %12, %13, %cst_9 {dimension_numbers = #tpu.dot_dimension_numbers<[1], [0], [0], [1], [0, 0, 1, 1], [], []>} : vector<64x32xbf16>, vector<32x32xbf16>, vector<64x32xf32> -> vector<64x32xf32>
    %c0_10 = arith.constant 0 : index
    %c32_11 = arith.constant 32 : index
    %15 = vector.load %arg4[%c0_10, %c32_11] : memref<1x192xf32, #tpu.memory_space<vmem>>, vector<1x32xf32>
    %16 = vector.broadcast %15 : vector<1x32xf32> to vector<64x32xf32>
    %17 = arith.addf %14, %16 : vector<64x32xf32>
    %18 = arith.addf %17, %11 : vector<64x32xf32>
    %cst_12 = arith.constant 0.000000e+00 : f32
    %19 = vector.broadcast %cst_12 : f32 to vector<64x32xf32>
    %20 = arith.maximumf %18, %19 : vector<64x32xf32>
    %21 = arith.truncf %20 : vector<64x32xf32> to vector<64x32xbf16>
    %22 = vector.shape_cast %21 : vector<64x32xbf16> to vector<8x8x32xbf16>
    %c8_i32 = arith.constant 8 : i32
    %23 = arith.muli %arg1, %c8_i32 : i32
    %c1_i32 = arith.constant 1 : i32
    %24 = arith.addi %c1_i32, %23 : i32
    %25 = arith.index_cast %24 : i32 to index
    %c1 = arith.constant 1 : index
    %c0_13 = arith.constant 0 : index
    %26 = vector.load %arg10[%25, %c1, %c0_13] : memref<10x10x32xbf16, #tpu.memory_space<vmem>>, vector<8x8x32xbf16>
    tpu.vector_store %arg10[%25, %c1, %c0_13], %22 {strides = array<i32>} : memref<10x10x32xbf16, #tpu.memory_space<vmem>>, vector<8x8x32xbf16>,
    %c64_i32 = arith.constant 64 : i32
    %27 = arith.muli %arg1, %c64_i32 : i32
    %28 = tpu.iota {dimensions = array<i32: 0>} : vector<64x1xi32>
    %29 = vector.broadcast %27 : i32 to vector<64x1xi32>
    %30 = arith.addi %28, %29 : vector<64x1xi32>
    %c0_14 = arith.constant 0 : index
    %c0_15 = arith.constant 0 : index
    %31 = vector.load %arg9[%c0_14, %c0_15] : memref<1x32xf32, #tpu.memory_space<vmem>>, vector<1x32xf32>
    %c64_i32_16 = arith.constant 64 : i32
    %32 = vector.broadcast %c64_i32_16 : i32 to vector<64x1xi32>
    %33 = arith.cmpi slt, %30, %32 : vector<64x1xi32>
    %cst_17 = arith.constant 0.000000e+00 : f32
    %34 = vector.shape_cast %33 : vector<64x1xi1> to vector<64x1xi1>
    %35 = vector.broadcast %34 : vector<64x1xi1> to vector<64x32xi1>
    %36 = vector.broadcast %cst_17 : f32 to vector<64x32xf32>
    %37 = arith.select %35, %20, %36 : vector<64x32xi1>, vector<64x32xf32>
    %cst_18 = arith.constant dense<0.000000e+00> : vector<32xf32>
    %38 = vector.multi_reduction <add>, %37, %cst_18 [0] : vector<64x32xf32> to vector<32xf32>
    %39 = vector.shape_cast %38 : vector<32xf32> to vector<1x32xf32>
    %40 = arith.addf %31, %39 : vector<1x32xf32>
    %c0_19 = arith.constant 0 : index
    %c0_20 = arith.constant 0 : index
    %41 = vector.load %arg9[%c0_19, %c0_20] : memref<1x32xf32, #tpu.memory_space<vmem>>, vector<1x32xf32>
    tpu.vector_store %arg9[%c0_19, %c0_20], %40 {strides = array<i32>} : memref<1x32xf32, #tpu.memory_space<vmem>>, vector<1x32xf32>,
    %c0_i32_21 = arith.constant 0 : i32
    %42 = arith.cmpi eq, %arg1, %c0_i32_21 : i32
    %43 = arith.extui %42 : i1 to i32
    %c0_i32_22 = arith.constant 0 : i32
    %44 = arith.cmpi ne, %43, %c0_i32_22 : i32
    scf.if %44 {
      %c0_23 = arith.constant 0 : index
      %c0_24 = arith.constant 0 : index
      %45 = vector.load %arg9[%c0_23, %c0_24] : memref<1x32xf32, #tpu.memory_space<vmem>>, vector<1x32xf32>
      %cst_25 = arith.constant 1.562500e-02 : f32
      %46 = vector.broadcast %cst_25 : f32 to vector<1x32xf32>
      %47 = arith.mulf %45, %46 : vector<1x32xf32>
      %48 = arith.truncf %47 : vector<1x32xf32> to vector<1x32xbf16>
      %c0_26 = arith.constant 0 : index
      %c64 = arith.constant 64 : index
      %49 = vector.load %arg3[%c0_26, %c64] : memref<32x192xbf16, #tpu.memory_space<vmem>>, vector<32x128xbf16>
      %cst_27 = arith.constant dense<0.000000e+00> : vector<1x128xf32>
      %50 = tpu.matmul %48, %49, %cst_27 {dimension_numbers = #tpu.dot_dimension_numbers<[1], [0], [0], [1], [0, 0, 1, 1], [], []>} : vector<1x32xbf16>, vector<32x128xbf16>, vector<1x128xf32> -> vector<1x128xf32>
      %c0_28 = arith.constant 0 : index
      %c64_29 = arith.constant 64 : index
      %51 = vector.load %arg4[%c0_28, %c64_29] : memref<1x192xf32, #tpu.memory_space<vmem>>, vector<1x128xf32>
      %52 = arith.addf %50, %51 : vector<1x128xf32>
      %c0_30 = arith.constant 0 : index
      %c0_31 = arith.constant 0 : index
      %c0_32 = arith.constant 0 : index
      %53 = vector.load %arg8[%c0_30, %c0_31, %c0_32] : memref<1x1x128xf32, #tpu.memory_space<vmem>>, vector<1x1x128xf32>
      %54 = vector.shape_cast %53 : vector<1x1x128xf32> to vector<1x128xf32>
      %55 = vector.shape_cast %52 : vector<1x128xf32> to vector<1x1x128xf32>
      tpu.vector_store %arg8[%c0_30, %c0_31, %c0_32], %55 {strides = array<i32>} : memref<1x1x128xf32, #tpu.memory_space<vmem>>, vector<1x1x128xf32>,
      %c0_33 = arith.constant 0 : index
      %c0_34 = arith.constant 0 : index
      %c0_35 = arith.constant 0 : index
      %56 = vector.load %arg10[%c0_33, %c0_34, %c0_35] : memref<10x10x32xbf16, #tpu.memory_space<vmem>>, vector<10x10x32xbf16>
      %57 = vector.extract_strided_slice %56 {offsets = [0, 0, 0], sizes = [8, 8, 32], strides = [1, 1, 1]} : vector<10x10x32xbf16> to vector<8x8x32xbf16>
      %58 = vector.shape_cast %57 : vector<8x8x32xbf16> to vector<64x32xbf16>
      %59 = vector.extract_strided_slice %56 {offsets = [0, 1, 0], sizes = [8, 8, 32], strides = [1, 1, 1]} : vector<10x10x32xbf16> to vector<8x8x32xbf16>
      %60 = vector.shape_cast %59 : vector<8x8x32xbf16> to vector<64x32xbf16>
      %61 = vector.extract_strided_slice %56 {offsets = [0, 2, 0], sizes = [8, 8, 32], strides = [1, 1, 1]} : vector<10x10x32xbf16> to vector<8x8x32xbf16>
      %62 = vector.shape_cast %61 : vector<8x8x32xbf16> to vector<64x32xbf16>
      %63 = vector.extract_strided_slice %56 {offsets = [1, 0, 0], sizes = [8, 8, 32], strides = [1, 1, 1]} : vector<10x10x32xbf16> to vector<8x8x32xbf16>
      %64 = vector.shape_cast %63 : vector<8x8x32xbf16> to vector<64x32xbf16>
      %65 = vector.extract_strided_slice %56 {offsets = [1, 1, 0], sizes = [8, 8, 32], strides = [1, 1, 1]} : vector<10x10x32xbf16> to vector<8x8x32xbf16>
      %66 = vector.shape_cast %65 : vector<8x8x32xbf16> to vector<64x32xbf16>
      %67 = vector.extract_strided_slice %56 {offsets = [1, 2, 0], sizes = [8, 8, 32], strides = [1, 1, 1]} : vector<10x10x32xbf16> to vector<8x8x32xbf16>
      %68 = vector.shape_cast %67 : vector<8x8x32xbf16> to vector<64x32xbf16>
      %69 = vector.extract_strided_slice %56 {offsets = [2, 0, 0], sizes = [8, 8, 32], strides = [1, 1, 1]} : vector<10x10x32xbf16> to vector<8x8x32xbf16>
      %70 = vector.shape_cast %69 : vector<8x8x32xbf16> to vector<64x32xbf16>
      %71 = vector.extract_strided_slice %56 {offsets = [2, 1, 0], sizes = [8, 8, 32], strides = [1, 1, 1]} : vector<10x10x32xbf16> to vector<8x8x32xbf16>
      %72 = vector.shape_cast %71 : vector<8x8x32xbf16> to vector<64x32xbf16>
      %73 = vector.extract_strided_slice %56 {offsets = [2, 2, 0], sizes = [8, 8, 32], strides = [1, 1, 1]} : vector<10x10x32xbf16> to vector<8x8x32xbf16>
      %74 = vector.shape_cast %73 : vector<8x8x32xbf16> to vector<64x32xbf16>
      %75 = tpu.concatenate %58, %60, %62, %64, %66, %68, %70, %72, %74 in 1 : vector<64x32xbf16>, vector<64x32xbf16>, vector<64x32xbf16>, vector<64x32xbf16>, vector<64x32xbf16>, vector<64x32xbf16>, vector<64x32xbf16>, vector<64x32xbf16>, vector<64x32xbf16> -> vector<64x288xbf16>
      %c0_36 = arith.constant 0 : index
      %c0_37 = arith.constant 0 : index
      %76 = vector.load %arg5[%c0_36, %c0_37] : memref<288x128xbf16, #tpu.memory_space<vmem>>, vector<288x128xbf16>
      %cst_38 = arith.constant dense<0.000000e+00> : vector<64x128xf32>
      %77 = tpu.matmul %75, %76, %cst_38 {dimension_numbers = #tpu.dot_dimension_numbers<[1], [0], [0], [1], [0, 0, 1, 1], [], []>} : vector<64x288xbf16>, vector<288x128xbf16>, vector<64x128xf32> -> vector<64x128xf32>
      %c0_39 = arith.constant 0 : index
      %c0_40 = arith.constant 0 : index
      %78 = vector.load %arg6[%c0_39, %c0_40] : memref<1x128xf32, #tpu.memory_space<vmem>>, vector<1x128xf32>
      %79 = vector.broadcast %78 : vector<1x128xf32> to vector<64x128xf32>
      %80 = arith.addf %77, %79 : vector<64x128xf32>
      %c0_41 = arith.constant 0 : index
      %c0_42 = arith.constant 0 : index
      %c0_43 = arith.constant 0 : index
      %81 = vector.load %arg7[%c0_41, %c0_42, %c0_43] : memref<1x64x128xf32, #tpu.memory_space<vmem>>, vector<1x64x128xf32>
      %82 = vector.shape_cast %81 : vector<1x64x128xf32> to vector<64x128xf32>
      %83 = vector.shape_cast %80 : vector<64x128xf32> to vector<1x64x128xf32>
      tpu.vector_store %arg7[%c0_41, %c0_42, %c0_43], %83 {strides = array<i32>} : memref<1x64x128xf32, #tpu.memory_space<vmem>>, vector<1x64x128xf32>,
    } else {
    }
    return
  }
  func.func @transform_0(%arg0: i32, %arg1: i32) -> (i32, i32, i32) {
    %c0_i32 = arith.constant 0 : i32
    %c0_i32_0 = arith.constant 0 : i32
    return %arg0, %arg1, %c0_i32 : i32, i32, i32
  }
  func.func @transform_1(%arg0: i32, %arg1: i32) -> (i32, i32) {
    %c0_i32 = arith.constant 0 : i32
    %c0_i32_0 = arith.constant 0 : i32
    %c0_i32_1 = arith.constant 0 : i32
    return %c0_i32, %c0_i32_0 : i32, i32
  }
  func.func @transform_2(%arg0: i32, %arg1: i32) -> (i32, i32) {
    %c0_i32 = arith.constant 0 : i32
    %c0_i32_0 = arith.constant 0 : i32
    %c0_i32_1 = arith.constant 0 : i32
    return %c0_i32, %c0_i32_0 : i32, i32
  }
  func.func @transform_3(%arg0: i32, %arg1: i32) -> (i32, i32) {
    %c0_i32 = arith.constant 0 : i32
    %c0_i32_0 = arith.constant 0 : i32
    %c0_i32_1 = arith.constant 0 : i32
    return %c0_i32, %c0_i32_0 : i32, i32
  }
  func.func @transform_4(%arg0: i32, %arg1: i32) -> (i32, i32) {
    %c0_i32 = arith.constant 0 : i32
    %c0_i32_0 = arith.constant 0 : i32
    %c0_i32_1 = arith.constant 0 : i32
    return %c0_i32, %c0_i32_0 : i32, i32
  }
  func.func @transform_5(%arg0: i32, %arg1: i32) -> (i32, i32, i32) {
    %c0_i32 = arith.constant 0 : i32
    %c0_i32_0 = arith.constant 0 : i32
    %c0_i32_1 = arith.constant 0 : i32
    return %arg0, %c0_i32, %c0_i32_0 : i32, i32, i32
  }
  func.func @transform_6(%arg0: i32, %arg1: i32) -> (i32, i32, i32) {
    %c0_i32 = arith.constant 0 : i32
    %c0_i32_0 = arith.constant 0 : i32
    %c0_i32_1 = arith.constant 0 : i32
    return %arg0, %c0_i32, %c0_i32_0 : i32, i32, i32
  }
}

</mosaic_0001>

<llo_original>
// kernel: network_forward.1
$region0: #{network_forward.1}
  #allocation0 [shape = 'u32[]', space=smem, size = 0x4, offset = 0x4, fixed_abs, tag = 'smem constant byte address 0x4 - core index']
  #allocation1 [shape = 'u32[144,128]{1,0:T(1,128)}', space=vmem, size = 0x12000, scoped, tag = 'internal scratch']
  #allocation2 [shape = 'f32[1,32]{1,0:T(1,128)}', space=vmem, size = 0x200, scoped, tag = 'scratch operand']
  #allocation3 [shape = 'bf16[10,10,32]{2,1,0:T(8,128)(2,1)}', space=vmem, size = 0xa000, scoped, tag = 'scratch operand']
  %s0 = inlined_call_operand.vmem [shape: bf16[2,64,32], index: 0, kind: input, shape index: {}]
  %s1 = inlined_call_operand.vmem [shape: bf16[32,192], index: 1, kind: input, shape index: {}]
  %s2 = inlined_call_operand.vmem [shape: f32[1,192], index: 2, kind: input, shape index: {}]
  %s3 = inlined_call_operand.vmem [shape: bf16[288,128], index: 3, kind: input, shape index: {}]
  %s4 = inlined_call_operand.vmem [shape: f32[1,128], index: 4, kind: input, shape index: {}]
  %s5 = inlined_call_operand.vmem [shape: f32[2,64,128], index: 5, kind: output, shape index: {0}]
  %s6 = inlined_call_operand.hbm [shape: f32[2,1,128], index: 6, kind: output, shape index: {1}]
  %7 = xla_tuple %s5, %s6
  %s8 = sld [smem:[#allocation0]]
  $region69: #{network_forward.1} parent=0
    _
  %s10 = ssub.s32 1, %s8
  %s11 = scalar_select 0, %s10, %s8
  $region1: #{network_forward.1} parent=0
    #allocation4 [shape = 'u8[1024]{0}', space=vmem, size = 0x400, scoped, tag = 'output window, operand 1']
    #allocation5 [shape = 's32[2]{0}', space=sflag, size = 0x8, scoped, tag = 'scoped memory for network_forward.1']
    %12 = vsyncpa [#allocation5], 0
    %s13 = scalar_lea.sflag [#allocation5], 1
    %14 = vsyncpa %s13, 0
    loop: start=0, step=1, limit=4
    $region2: #{network_forward.1} parent=1 // loop_pre_header
      _
    $region3: #{network_forward.1} parent=1 // loop_header
      %s16 = sphi 0, %s20
      %p17 = scmp.ge.s32.totalorder %s16, 4
      %s23 = sphi 0, %s35
      %s24 = sphi 0, %s31
      %s25 = sphi 0, %s23
      %s26 = sphi 0, %s24
      %s27 = sphi 0, %s25
      %s28 = sphi 0, %s26
      %s40 = sphi 0, %s42
      %s43 = sphi 0, %s40
      %s44 = sphi 0, %s43
      %s60 = sphi 0, %s44
      %s64 = sphi 0, %s64
      %s66 = sphi 0, %s64
      %s67 = sphi 0, %s66
      %s81 = sphi 0, %s67
      %s85 = sphi 0, %s85
      %s87 = sphi 0, %s85
      %s88 = sphi 0, %s87
      %s102 = sphi 0, %s88
      %s106 = sphi 0, %s106
      %s108 = sphi 0, %s106
      %s109 = sphi 0, %s108
      %s123 = sphi 0, %s109
      %s127 = sphi 0, %s127
      %s129 = sphi 0, %s127
      %s130 = sphi 0, %s129
      %s144 = sphi 0, %s130
      %s150 = sphi 0, %s152
      %s153 = sphi 0, %s150
      %s154 = sphi 0, %s153
      %s170 = sphi 0, %s154
      %s176 = sphi 0, %s178
      %s179 = sphi 0, %s176
      %s180 = sphi 0, %s179
      %s196 = sphi 0, %s180
    $region4: #{network_forward.1} parent=1 // loop_header_branch
      %19 = sbr.rel (%p17) target = $region8
    $region5: #{network_forward.1} parent=1 // loop_body
      %s21 = ssub.s32 %s16, 1
      %s22 = ssub.s32 %s16, 2
      %s29 = sadd.s32 1, %s24
      %p30 = scmp.ge.s32.totalorder %s29, 1
      %s31 = scalar_select %p30, 0, %s29
      %s32 = sadd.s32 1, %s23
      %s33 = scalar_select %p30, %s32, %s23
      %p34 = scmp.ge.s32.totalorder %s33, 2
      %s35 = scalar_select %p34, 0, %s33
      %s36 = ssub.s32 %s23, %s35
      %s37 = ssub.s32 %s24, %s31
      %s38 = sor.u32 %s36, %s37
      %p39 = scmp.eq.s32.totalorder %s38, 0
      %s41 = sadd.s32 %s40, 1
      %s42 = scalar_select %p39, %s40, %s41
      %p45 = pneg %p39
      %p46 = scmp.eq.s32.totalorder %s16, 1
      %p47 = por %p45, %p46
      %p48 = scmp.ne.s32.totalorder %s40, %s43
      %p49 = scmp.eq.s32.totalorder %s16, 0
      %p50 = por %p48, %p49
      %p51 = scmp.ne.s32.totalorder %s40, %s43
      %p52 = scmp.eq.s32.totalorder %s21, 1
      %p53 = por %p51, %p52
      %p54 = scmp.ne.s32.totalorder %s43, %s44
      %p55 = scmp.eq.s32.totalorder %s21, 0
      %p56 = por %p54, %p55
      %p57 = scmp.ne.s32.totalorder %s43, %s44
      %p58 = scmp.eq.s32.totalorder %s22, 1
      %p59 = por %p57, %p58
      %p61 = scmp.ne.s32.totalorder %s44, %s60
      %p62 = scmp.eq.s32.totalorder %s22, 0
      %p63 = por %p61, %p62
      %s65 = sadd.s32 %s64, 1
      %p68 = scmp.eq.s32.totalorder %s16, 1
      %p69 = scmp.ne.s32.totalorder %s64, %s66
      %p70 = scmp.eq.s32.totalorder %s16, 0
      %p71 = por %p69, %p70
      %p72 = scmp.ne.s32.totalorder %s64, %s66
      %p73 = scmp.eq.s32.totalorder %s21, 1
      %p74 = por %p72, %p73
      %p75 = scmp.ne.s32.totalorder %s66, %s67
      %p76 = scmp.eq.s32.totalorder %s21, 0
      %p77 = por %p75, %p76
      %p78 = scmp.ne.s32.totalorder %s66, %s67
      %p79 = scmp.eq.s32.totalorder %s22, 1
      %p80 = por %p78, %p79
      %p82 = scmp.ne.s32.totalorder %s67, %s81
      %p83 = scmp.eq.s32.totalorder %s22, 0
      %p84 = por %p82, %p83
      %s86 = sadd.s32 %s85, 1
      %p89 = scmp.eq.s32.totalorder %s16, 1
      %p90 = scmp.ne.s32.totalorder %s85, %s87
      %p91 = scmp.eq.s32.totalorder %s16, 0
      %p92 = por %p90, %p91
      %p93 = scmp.ne.s32.totalorder %s85, %s87
      %p94 = scmp.eq.s32.totalorder %s21, 1
      %p95 = por %p93, %p94
      %p96 = scmp.ne.s32.totalorder %s87, %s88
      %p97 = scmp.eq.s32.totalorder %s21, 0
      %p98 = por %p96, %p97
      %p99 = scmp.ne.s32.totalorder %s87, %s88
      %p100 = scmp.eq.s32.totalorder %s22, 1
      %p101 = por %p99, %p100
      %p103 = scmp.ne.s32.totalorder %s88, %s102
      %p104 = scmp.eq.s32.totalorder %s22, 0
      %p105 = por %p103, %p104
      %s107 = sadd.s32 %s106, 1
      %p110 = scmp.eq.s32.totalorder %s16, 1
      %p111 = scmp.ne.s32.totalorder %s106, %s108
      %p112 = scmp.eq.s32.totalorder %s16, 0
      %p113 = por %p111, %p112
      %p114 = scmp.ne.s32.totalorder %s106, %s108
      %p115 = scmp.eq.s32.totalorder %s21, 1
      %p116 = por %p114, %p115
      %p117 = scmp.ne.s32.totalorder %s108, %s109
      %p118 = scmp.eq.s32.totalorder %s21, 0
      %p119 = por %p117, %p118
      %p120 = scmp.ne.s32.totalorder %s108, %s109
      %p121 = scmp.eq.s32.totalorder %s22, 1
      %p122 = por %p120, %p121
      %p124 = scmp.ne.s32.totalorder %s109, %s123
      %p125 = scmp.eq.s32.totalorder %s22, 0
      %p126 = por %p124, %p125
      %s128 = sadd.s32 %s127, 1
      %p131 = scmp.eq.s32.totalorder %s16, 1
      %p132 = scmp.ne.s32.totalorder %s127, %s129
      %p133 = scmp.eq.s32.totalorder %s16, 0
      %p134 = por %p132, %p133
      %p135 = scmp.ne.s32.totalorder %s127, %s129
      %p136 = scmp.eq.s32.totalorder %s21, 1
      %p137 = por %p135, %p136
      %p138 = scmp.ne.s32.totalorder %s129, %s130
      %p139 = scmp.eq.s32.totalorder %s21, 0
      %p140 = por %p138, %p139
      %p141 = scmp.ne.s32.totalorder %s129, %s130
      %p142 = scmp.eq.s32.totalorder %s22, 1
      %p143 = por %p141, %p142
      %p145 = scmp.ne.s32.totalorder %s130, %s144
      %p146 = scmp.eq.s32.totalorder %s22, 0
      %p147 = por %p145, %p146
      %s148 = ssub.s32 %s23, %s35
      %p149 = scmp.eq.s32.totalorder %s148, 0
      %s151 = sadd.s32 %s150, 1
      %s152 = scalar_select %p149, %s150, %s151
      %p155 = pneg %p149
      %p156 = scmp.eq.s32.totalorder %s16, 1
      %p157 = por %p155, %p156
      %p158 = scmp.ne.s32.totalorder %s150, %s153
      %p159 = scmp.eq.s32.totalorder %s16, 0
      %p160 = por %p158, %p159
      %p161 = scmp.ne.s32.totalorder %s150, %s153
      %p162 = scmp.eq.s32.totalorder %s21, 1
      %p163 = por %p161, %p162
      %p164 = scmp.ne.s32.totalorder %s153, %s154
      %p165 = scmp.eq.s32.totalorder %s21, 0
      %p166 = por %p164, %p165
      %p167 = scmp.ne.s32.totalorder %s153, %s154
      %p168 = scmp.eq.s32.totalorder %s22, 1
      %p169 = por %p167, %p168
      %p171 = scmp.ne.s32.totalorder %s154, %s170
      %p172 = scmp.eq.s32.totalorder %s22, 0
      %p173 = por %p171, %p172
      %s174 = ssub.s32 %s23, %s35
      %p175 = scmp.eq.s32.totalorder %s174, 0
      %s177 = sadd.s32 %s176, 1
      %s178 = scalar_select %p175, %s176, %s177
      %p181 = pneg %p175
      %p182 = scmp.eq.s32.totalorder %s16, 1
      %p183 = por %p181, %p182
      %p184 = scmp.ne.s32.totalorder %s176, %s179
      %p185 = scmp.eq.s32.totalorder %s16, 0
      %p186 = por %p184, %p185
      %p187 = scmp.ne.s32.totalorder %s176, %s179
      %p188 = scmp.eq.s32.totalorder %s21, 1
      %p189 = por %p187, %p188
      %p190 = scmp.ne.s32.totalorder %s179, %s180
      %p191 = scmp.eq.s32.totalorder %s21, 0
      %p192 = por %p190, %p191
      %p193 = scmp.ne.s32.totalorder %s179, %s180
      %p194 = scmp.eq.s32.totalorder %s22, 1
      %p195 = por %p193, %p194
      %p197 = scmp.ne.s32.totalorder %s180, %s196
      %p198 = scmp.eq.s32.totalorder %s22, 0
      %p199 = por %p197, %p198
      %p200 = scmp.le.s32.totalorder 1, %s16
      %p201 = scmp.lt.s32.totalorder %s16, 3
      %p202 = pnand %p200, %p201
      %p203 = pneg %p202
      // Predicated region
      $region9: #{network_forward.1} parent=5 // pred_check
        _
      $region10: #{network_forward.1} parent=5 // pred_check_branch
        %205 = sbr.rel (%p202) target = $region12
      $region11: #{network_forward.1} parent=5 // pred_region
        %s206 = ssub.s32 %s16, 1
        // Predicated region
        $region13: #{network_forward.1} parent=11 // pred_check
          %p207 = pneg %p77
        $region14: #{network_forward.1} parent=11 // pred_check_branch
          %209 = sbr.rel (%p207) target = $region16
        $region15: #{network_forward.1} parent=11 // pred_region
          _
        $region16: #{network_forward.1} parent=11 // pred_fallthru
          _
        // Predicated region
        $region17: #{network_forward.1} parent=11 // pred_check
          %p210 = pneg %p98
        $region18: #{network_forward.1} parent=11 // pred_check_branch
          %212 = sbr.rel (%p210) target = $region20
        $region19: #{network_forward.1} parent=11 // pred_region
          _
        $region20: #{network_forward.1} parent=11 // pred_fallthru
          _
        // Predicated region
        $region21: #{network_forward.1} parent=11 // pred_check
          %p213 = pneg %p119
        $region22: #{network_forward.1} parent=11 // pred_check_branch
          %215 = sbr.rel (%p213) target = $region24
        $region23: #{network_forward.1} parent=11 // pred_region
          _
        $region24: #{network_forward.1} parent=11 // pred_fallthru
          _
        // Predicated region
        $region25: #{network_forward.1} parent=11 // pred_check
          %p216 = pneg %p140
        $region26: #{network_forward.1} parent=11 // pred_check_branch
          %218 = sbr.rel (%p216) target = $region28
        $region27: #{network_forward.1} parent=11 // pred_region
          _
        $region28: #{network_forward.1} parent=11 // pred_fallthru
          _
      $region12: #{network_forward.1} parent=5 // pred_fallthru
        _
      %p219 = scmp.lt.s32.totalorder %s16, 2
      // Predicated region
      $region29: #{network_forward.1} parent=5 // pred_check
        %p220 = pneg %p219
      $region30: #{network_forward.1} parent=5 // pred_check_branch
        %222 = sbr.rel (%p220) target = $region32
      $region31: #{network_forward.1} parent=5 // pred_region
        // Predicated region
        $region33: #{network_forward.1} parent=31 // pred_check
          %p223 = pneg %p50
        $region34: #{network_forward.1} parent=31 // pred_check_branch
          %225 = sbr.rel (%p223) target = $region36
        $region35: #{network_forward.1} parent=31 // pred_region
          %s226 = smul.u32 8, %s24
          %p227 = scmp.lt.s32.totalorder %s23, 1
          %s228 = scalar_select %p227, %s23, 1
          %p229 = scmp.lt.s32.totalorder %s226, 7
          %s230 = scalar_select %p229, %s226, 7
          %s231 = smul.addr %s228, 8
          %s232 = sadd.s32 %s230, %s231
          %s233 = smul.addr %s232, 4
          %s234 = scalar_lea.vmem %s0, %s233
          %s235 = smul.u32 8, %s24
        $region36: #{network_forward.1} parent=31 // pred_fallthru
          _
      $region32: #{network_forward.1} parent=5 // pred_fallthru
        _
      %p236 = scmp.le.s32.totalorder 1, %s16
      %p237 = scmp.lt.s32.totalorder %s16, 3
      %p238 = pnand %p236, %p237
      %p239 = pneg %p238
      // Predicated region
      $region37: #{network_forward.1} parent=5 // pred_check
        _
      $region38: #{network_forward.1} parent=5 // pred_check_branch
        %241 = sbr.rel (%p238) target = $region40
      $region39: #{network_forward.1} parent=5 // pred_region
        %s242 = ssub.s32 %s16, 1
        %s243 = smul.u32 8, %s26
        %p244 = scmp.lt.s32.totalorder %s25, 1
        %s245 = scalar_select %p244, %s25, 1
        %p246 = scmp.lt.s32.totalorder %s243, 7
        %s247 = scalar_select %p246, %s243, 7
        %s248 = smul.addr %s245, 8
        %s249 = sadd.s32 %s247, %s248
        %s250 = smul.addr %s249, 4
        %s251 = scalar_lea.vmem %s0, %s250
        %p252 = pneg %p56
        %p253 = pneg %p53
        %p254 = pneg %p77
        %p255 = pneg %p74
        %p256 = pneg %p98
        %p257 = pneg %p95
        %p258 = pneg %p119
        %p259 = pneg %p116
        %p260 = pneg %p140
        %p261 = pneg %p137
        %p262 = pneg %p166
        %p263 = pneg %p163
        %p264 = scmp.lt.s32.totalorder %s25, 1
        %s265 = scalar_select %p264, %s25, 1
        %s266 = smul.addr %s265, 8
        %s267 = smul.addr %s266, 8
        %s268 = scalar_lea.vmem %s5, %s267
        %p269 = pneg %p192
        %p270 = pneg %p189
        %s271 = sand.u32 %s179, 1
        %s272 = scalar_lea.sflag [#allocation5], %s271
        %s273 = sand.u32 %s179, 1
        %s274 = scalar_lea.vmem [#allocation4], %s273
        %s275 = smul.u32 8, %s26
        %p276 = scmp.lt.s32.totalorder %s25, 1
        %s277 = scalar_select %p276, %s25, 1
        %p278 = scmp.lt.s32.totalorder %s275, 7
        %s279 = scalar_select %p278, %s275, 7
        %s280 = smul.addr %s277, 8
        %s281 = sadd.s32 %s279, %s280
        %s282 = smul.addr %s281, 4
        %s283 = scalar_lea.vmem %s0, %s282
        %s284 = smul.u32 8, %s26
        %p285 = scmp.lt.s32.totalorder %s25, 1
        %s286 = scalar_select %p285, %s25, 1
        %s287 = smul.addr %s286, 8
        %s288 = smul.addr %s287, 8
        %s289 = scalar_lea.vmem %s5, %s288
        %p291 = scmp.eq.s32.totalorder %s26, 0
        // Predicated region
        $region41: #{network_forward.1} parent=39 // pred_check
          %p292 = pneg %p291
        $region42: #{network_forward.1} parent=39 // pred_check_branch
          %294 = sbr.rel (%p292) target = $region44
        $region43: #{network_forward.1} parent=39 // pred_region
          %vm295 = vcmask 253952
          %296 = vst.msk [vmem:[#allocation2] sm:$0x1] %vm295, 0.0
          %vm297 = vcmask 257024
          %298 = vst.msk [vmem:[#allocation3] sm:$0xf] %vm297, 0
          %299 = vst.msk [vmem:[#allocation3 + $0x4] sm:$0x1] %vm295, 0
          %300 = vst.msk [vmem:[#allocation3 + $0x8] sm:$0xf] %vm297, 0
          %301 = vst.msk [vmem:[#allocation3 + $0xc] sm:$0x1] %vm295, 0
          %302 = vst.msk [vmem:[#allocation3 + $0x10] sm:$0xf] %vm297, 0
          %303 = vst.msk [vmem:[#allocation3 + $0x14] sm:$0x1] %vm295, 0
          %304 = vst.msk [vmem:[#allocation3 + $0x18] sm:$0xf] %vm297, 0
          %305 = vst.msk [vmem:[#allocation3 + $0x1c] sm:$0x1] %vm295, 0
          %306 = vst.msk [vmem:[#allocation3 + $0x20] sm:$0xf] %vm297, 0
          %307 = vst.msk [vmem:[#allocation3 + $0x24] sm:$0x1] %vm295, 0
          %308 = vst.msk [vmem:[#allocation3 + $0x28] sm:$0xf] %vm297, 0
          %309 = vst.msk [vmem:[#allocation3 + $0x2c] sm:$0x1] %vm295, 0
          %310 = vst.msk [vmem:[#allocation3 + $0x30] sm:$0xf] %vm297, 0
          %311 = vst.msk [vmem:[#allocation3 + $0x34] sm:$0x1] %vm295, 0
          %312 = vst.msk [vmem:[#allocation3 + $0x38] sm:$0xf] %vm297, 0
          %313 = vst.msk [vmem:[#allocation3 + $0x3c] sm:$0x1] %vm295, 0
          %314 = vst.msk [vmem:[#allocation3 + $0x40] sm:$0xf] %vm297, 0
          %315 = vst.msk [vmem:[#allocation3 + $0x44] sm:$0x1] %vm295, 0
          %316 = vst.msk [vmem:[#allocation3 + $0x48] sm:$0xf] %vm297, 0
          %317 = vst.msk [vmem:[#allocation3 + $0x4c] sm:$0x1] %vm295, 0
        $region44: #{network_forward.1} parent=39 // pred_fallthru
          _
        %v318 = vld [vmem:[%s283] sm:$0xf]
        %v319 = vld [vmem:[%s283 + $0x4] sm:$0xf]
        %v320 = vld [vmem:[%s283 + $0x8] sm:$0xf]
        %v321 = vld [vmem:[%s283 + $0xc] sm:$0xf]
        %v322 = vld [vmem:[%s283 + $0x10] sm:$0xf]
        %v323 = vld [vmem:[%s283 + $0x14] sm:$0xf]
        %v324 = vld [vmem:[%s283 + $0x18] sm:$0xf]
        %v325 = vld [vmem:[%s283 + $0x1c] sm:$0xf]
        %v326 = vld [vmem:[%s1] sm:$0xf]
        %v327 = vld [vmem:[%s1 + $0x8] sm:$0xf]
        %v328 = vld [vmem:[%s1 + $0x10] sm:$0xf]
        %v329 = vld [vmem:[%s1 + $0x18] sm:$0xf]
        %v330 = vld [vmem:[%s2] sm:$0x1]
        %v332 = vlaneseq
        %v333 = vshrl.u32 %v332, 7
        %v334 = vsub.s32 0, %v333
        %v335 = vrot.slane %v330, %v334
        %v345 = vunpack.c.l.b16 %v318
        %v346 = vunpack.c.l.b16 %v319
        %v347 = vunpack.c.l.b16 %v320
        %v348 = vunpack.c.l.b16 %v321
        %v349 = vunpack.c.l.b16 %v322
        %v350 = vunpack.c.l.b16 %v323
        %v351 = vunpack.c.l.b16 %v324
        %v352 = vunpack.c.l.b16 %v325
        %v353 = vpack.c.b16 %v346, %v345
        %v354 = vpack.c.b16 %v348, %v347
        %v355 = vpack.c.b16 %v350, %v349
        %v356 = vpack.c.b16 %v352, %v351
        %v361 = vunpack.c.l.b16 %v326
        %v362 = vunpack.c.l.b16 %v327
        %v363 = vunpack.c.l.b16 %v328
        %v364 = vunpack.c.l.b16 %v329
        %v365 = vpack.c.b16 %v362, %v361
        %v366 = vpack.c.b16 %v364, %v363
        %vm369 = vcmask 261120
        %v371 = vsel %vm369, %v353, 0
        %v374 = vsel %vm369, %v354, 0
        %v377 = vsel %vm369, %v355, 0
        %v380 = vsel %vm369, %v356, 0
        %382 = vmatprep.subr.bf16.mxu0 0
        %383 = vmatpush1.bf16.msra.mxu0 %v365
        %384 = vmatprep.subr.bf16.mxu0 0
        %385 = vmatpush1.bf16.msra.mxu0 %v366
        %386 = vmatprep.subr.bf16.mxu0 0
        %387 = vmatpush1.bf16.msra.mxu0 0
        %388 = vmatprep.subr.bf16.mxu0 0
        %389 = vmatpush1.bf16.msra.mxu0 0
        %390 = vmatprep.subr.bf16.mxu0 0
        %391 = vmatpush1.bf16.msra.mxu0 0
        %392 = vmatprep.subr.bf16.mxu0 0
        %393 = vmatpush1.bf16.msra.mxu0 0
        %394 = vmatprep.subr.bf16.mxu0 0
        %395 = vmatpush1.bf16.msra.mxu0 0
        %396 = vmatprep.subr.bf16.mxu0 0
        %397 = vmatpush1.bf16.msra.mxu0 0
        %398 = vmatprep.subr.bf16.mxu0 0
        %399 = vmatpush1.bf16.msra.mxu0 0
        %400 = vmatprep.subr.bf16.mxu0 0
        %401 = vmatpush1.bf16.msra.mxu0 0
        %402 = vmatprep.subr.bf16.mxu0 0
        %403 = vmatpush1.bf16.msra.mxu0 0
        %404 = vmatprep.subr.bf16.mxu0 0
        %405 = vmatpush1.bf16.msra.mxu0 0
        %406 = vmatprep.subr.bf16.mxu0 0
        %407 = vmatpush1.bf16.msra.mxu0 0
        %408 = vmatprep.subr.bf16.mxu0 0
        %409 = vmatpush1.bf16.msra.mxu0 0
        %410 = vmatprep.subr.bf16.mxu0 0
        %411 = vmatpush1.bf16.msra.mxu0 0
        %412 = vmatprep.subr.bf16.mxu0 0
        %413 = vmatpush1.bf16.msra.mxu0 0
        %414 = vmatprep.mubr.bf16.mxu0 0
        %415 = vmatmul.mubr.bf16.gmra.mrb[0].mxu0 %v371
        %v416 = vpop.f32.mrb[0].mxu0
        %v417 = vadd.f32 %v335, %v416
        %v418 = vpop.f32.mrb[0].mxu0
        %v419 = vpop.f32.mrb[0].mxu0
        %v420 = vadd.f32 %v335, %v419
        %v421 = vpop.f32.mrb[0].mxu0
        %422 = vmatprep.mubr.bf16.mxu0 0
        %423 = vmatmul.mubr.bf16.gmra.mrb[0].mxu0 %v374
        %v424 = vpop.f32.mrb[0].mxu0
        %v425 = vadd.f32 %v335, %v424
        %v426 = vpop.f32.mrb[0].mxu0
        %v427 = vpop.f32.mrb[0].mxu0
        %v428 = vadd.f32 %v335, %v427
        %v429 = vpop.f32.mrb[0].mxu0
        %430 = vmatprep.mubr.bf16.mxu0 0
        %431 = vmatmul.mubr.bf16.gmra.mrb[0].mxu0 %v377
        %v432 = vpop.f32.mrb[0].mxu0
        %v433 = vadd.f32 %v335, %v432
        %v434 = vpop.f32.mrb[0].mxu0
        %v435 = vpop.f32.mrb[0].mxu0
        %v436 = vadd.f32 %v335, %v435
        %v437 = vpop.f32.mrb[0].mxu0
        %438 = vmatprep.mubr.bf16.mxu0 0
        %439 = vmatmul.mubr.bf16.gmra.mrb[0].mxu0 %v380
        %v440 = vpop.f32.mrb[0].mxu0
        %v441 = vadd.f32 %v335, %v440
        %v442 = vpop.f32.mrb[0].mxu0
        %v443 = vpop.f32.mrb[0].mxu0
        %v444 = vadd.f32 %v335, %v443
        %v445 = vpop.f32.mrb[0].mxu0
        %446 = vdwg.mxu0
        %v447 = vmax.f32 %v417, 0.0
        %v448 = vmax.f32 %v420, 0.0
        %v449 = vmax.f32 %v425, 0.0
        %v450 = vmax.f32 %v428, 0.0
        %v451 = vmax.f32 %v433, 0.0
        %v452 = vmax.f32 %v436, 0.0
        %v453 = vmax.f32 %v441, 0.0
        %v454 = vmax.f32 %v444, 0.0
        %v455 = vpack.c.bf16 %v448, %v447
        %v456 = vpack.c.bf16 %v450, %v449
        %v457 = vpack.c.bf16 %v452, %v451
        %v458 = vpack.c.bf16 %v454, %v453
        %459 = vrot.lane.b32.xlu0 %v365, 96
        %v460 = vpop.permute.xlu0 %459
        %461 = vrot.lane.b32.xlu0 %v366, 96
        %v462 = vpop.permute.xlu0 %461
        %465 = vrot.lane.b32.xlu0 %v335, 96
        %v466 = vpop.permute.xlu0 %465
        %v469 = vsel %vm369, %v455, 0
        %v472 = vsel %vm369, %v456, 0
        %v475 = vsel %vm369, %v457, 0
        %v478 = vsel %vm369, %v458, 0
        %480 = vmatprep.subr.bf16.mxu0 0
        %481 = vmatpush1.bf16.msra.mxu0 %v460
        %482 = vmatprep.subr.bf16.mxu0 0
        %483 = vmatpush1.bf16.msra.mxu0 %v462
        %484 = vmatprep.subr.bf16.mxu0 0
        %485 = vmatpush1.bf16.msra.mxu0 0
        %486 = vmatprep.subr.bf16.mxu0 0
        %487 = vmatpush1.bf16.msra.mxu0 0
        %488 = vmatprep.subr.bf16.mxu0 0
        %489 = vmatpush1.bf16.msra.mxu0 0
        %490 = vmatprep.subr.bf16.mxu0 0
        %491 = vmatpush1.bf16.msra.mxu0 0
        %492 = vmatprep.subr.bf16.mxu0 0
        %493 = vmatpush1.bf16.msra.mxu0 0
        %494 = vmatprep.subr.bf16.mxu0 0
        %495 = vmatpush1.bf16.msra.mxu0 0
        %496 = vmatprep.subr.bf16.mxu0 0
        %497 = vmatpush1.bf16.msra.mxu0 0
        %498 = vmatprep.subr.bf16.mxu0 0
        %499 = vmatpush1.bf16.msra.mxu0 0
        %500 = vmatprep.subr.bf16.mxu0 0
        %501 = vmatpush1.bf16.msra.mxu0 0
        %502 = vmatprep.subr.bf16.mxu0 0
        %503 = vmatpush1.bf16.msra.mxu0 0
        %504 = vmatprep.subr.bf16.mxu0 0
        %505 = vmatpush1.bf16.msra.mxu0 0
        %506 = vmatprep.subr.bf16.mxu0 0
        %507 = vmatpush1.bf16.msra.mxu0 0
        %508 = vmatprep.subr.bf16.mxu0 0
        %509 = vmatpush1.bf16.msra.mxu0 0
        %510 = vmatprep.subr.bf16.mxu0 0
        %511 = vmatpush1.bf16.msra.mxu0 0
        %512 = vmatprep.mubr.bf16.mxu0 0
        %513 = vmatmul.mubr.bf16.gmra.mrb[0].mxu0 %v469
        %v514 = vpop.f32.mrb[0].mxu0
        %v515 = vadd.f32 %v466, %v514
        %v516 = vpop.f32.mrb[0].mxu0
        %v517 = vpop.f32.mrb[0].mxu0
        %v518 = vadd.f32 %v466, %v517
        %v519 = vpop.f32.mrb[0].mxu0
        %520 = vmatprep.mubr.bf16.mxu0 0
        %521 = vmatmul.mubr.bf16.gmra.mrb[0].mxu0 %v472
        %v522 = vpop.f32.mrb[0].mxu0
        %v523 = vadd.f32 %v466, %v522
        %v524 = vpop.f32.mrb[0].mxu0
        %v525 = vpop.f32.mrb[0].mxu0
        %v526 = vadd.f32 %v466, %v525
        %v527 = vpop.f32.mrb[0].mxu0
        %528 = vmatprep.mubr.bf16.mxu0 0
        %529 = vmatmul.mubr.bf16.gmra.mrb[0].mxu0 %v475
        %v530 = vpop.f32.mrb[0].mxu0
        %v531 = vadd.f32 %v466, %v530
        %v532 = vpop.f32.mrb[0].mxu0
        %v533 = vpop.f32.mrb[0].mxu0
        %v534 = vadd.f32 %v466, %v533
        %v535 = vpop.f32.mrb[0].mxu0
        %536 = vmatprep.mubr.bf16.mxu0 0
        %537 = vmatmul.mubr.bf16.gmra.mrb[0].mxu0 %v478
        %v538 = vpop.f32.mrb[0].mxu0
        %v539 = vadd.f32 %v466, %v538
        %v540 = vpop.f32.mrb[0].mxu0
        %v541 = vpop.f32.mrb[0].mxu0
        %v542 = vadd.f32 %v466, %v541
        %v543 = vpop.f32.mrb[0].mxu0
        %544 = vdwg.mxu0
        %v545 = vadd.f32 %v515, %v447
        %v546 = vadd.f32 %v518, %v448
        %v547 = vadd.f32 %v523, %v449
        %v548 = vadd.f32 %v526, %v450
        %v549 = vadd.f32 %v531, %v451
        %v550 = vadd.f32 %v534, %v452
        %v551 = vadd.f32 %v539, %v453
        %v552 = vadd.f32 %v542, %v454
        %v553 = vmax.f32 %v545, 0.0
        %v554 = vmax.f32 %v546, 0.0
        %v555 = vmax.f32 %v547, 0.0
        %v556 = vmax.f32 %v548, 0.0
        %v557 = vmax.f32 %v549, 0.0
        %v558 = vmax.f32 %v550, 0.0
        %v559 = vmax.f32 %v551, 0.0
        %v560 = vmax.f32 %v552, 0.0
        %v561 = vpack.c.bf16 %v554, %v553
        %v562 = vpack.c.bf16 %v556, %v555
        %v563 = vpack.c.bf16 %v558, %v557
        %v564 = vpack.c.bf16 %v560, %v559
        %v569 = vunpack.c.l.b16 %v561
        %v570 = vunpack.c.h.b16 %v561
        %v571 = vunpack.c.l.b16 %v562
        %v572 = vunpack.c.h.b16 %v562
        %v573 = vunpack.c.l.b16 %v563
        %v574 = vunpack.c.h.b16 %v563
        %v575 = vunpack.c.l.b16 %v564
        %v576 = vunpack.c.h.b16 %v564
        %v577 = vpack.c.b16 %v569, %v569
        %v578 = vpack.c.b16 %v570, %v570
        %v579 = vpack.c.b16 %v571, %v571
        %v580 = vpack.c.b16 %v572, %v572
        %v581 = vpack.c.b16 %v573, %v573
        %v582 = vpack.c.b16 %v574, %v574
        %v583 = vpack.c.b16 %v575, %v575
        %v584 = vpack.c.b16 %v576, %v576
        %s585 = smul.u32 %s26, 8
        %s586 = sadd.s32 %s585, 1
        %v588 = vshrl.u32 %v577, 16
        %v590 = vrot.slane %v588, 7
        %v591 = vshll.u32 %v577, 16
        %v593 = vor.u32 %v590, %v591
        %v594 = vrot.slane %v590, 4
        %v596 = vshrl.u32 %v578, 16
        %v598 = vrot.slane %v596, 7
        %v599 = vshll.u32 %v578, 16
        %v601 = vor.u32 %v598, %v599
        %v602 = vrot.slane %v598, 4
        %v604 = vshrl.u32 %v579, 16
        %v606 = vrot.slane %v604, 7
        %v607 = vshll.u32 %v579, 16
        %v609 = vor.u32 %v606, %v607
        %v610 = vrot.slane %v606, 4
        %v612 = vshrl.u32 %v580, 16
        %v614 = vrot.slane %v612, 7
        %v615 = vshll.u32 %v580, 16
        %v617 = vor.u32 %v614, %v615
        %v618 = vrot.slane %v614, 4
        %v620 = vshrl.u32 %v581, 16
        %v622 = vrot.slane %v620, 7
        %v623 = vshll.u32 %v581, 16
        %v625 = vor.u32 %v622, %v623
        %v626 = vrot.slane %v622, 4
        %v628 = vshrl.u32 %v582, 16
        %v630 = vrot.slane %v628, 7
        %v631 = vshll.u32 %v582, 16
        %v633 = vor.u32 %v630, %v631
        %v634 = vrot.slane %v630, 4
        %v636 = vshrl.u32 %v583, 16
        %v638 = vrot.slane %v636, 7
        %v639 = vshll.u32 %v583, 16
        %v641 = vor.u32 %v638, %v639
        %v642 = vrot.slane %v638, 4
        %v644 = vshrl.u32 %v584, 16
        %v646 = vrot.slane %v644, 7
        %v647 = vshll.u32 %v584, 16
        %v649 = vor.u32 %v646, %v647
        %v650 = vrot.slane %v646, 4
        %s667 = smul.u32 %s586, 2
        %s668 = smul.addr %s667, 4
        %s669 = scalar_lea.vmem [#allocation3], %s668
        %vm670 = vcmask 257024
        %vm671 = vsmask.f32 7938
        %vm672 = vmand %vm670, %vm671
        %v673 = vld [vmem:[%s669] sm:$0xf]
        %v674 = vsel %vm672, %v593, %v673
        %675 = vst [vmem:[%s669] sm:$0xf] %v674
        %vm676 = vcmask 253952
        %vm677 = vsmask.f32 256
        %vm678 = vmand %vm676, %vm677
        %v679 = vld [vmem:[%s669 + $0x4] sm:$0x1]
        %v680 = vsel %vm678, %v594, %v679
        %681 = vst [vmem:[%s669 + $0x4] sm:$0x1] %v680
        %v682 = vld [vmem:[%s669 + $0x8] sm:$0xf]
        %v683 = vsel %vm672, %v601, %v682
        %684 = vst [vmem:[%s669 + $0x8] sm:$0xf] %v683
        %v685 = vld [vmem:[%s669 + $0xc] sm:$0x1]
        %v686 = vsel %vm678, %v602, %v685
        %687 = vst [vmem:[%s669 + $0xc] sm:$0x1] %v686
        %v688 = vld [vmem:[%s669 + $0x10] sm:$0xf]
        %v689 = vsel %vm672, %v609, %v688
        %690 = vst [vmem:[%s669 + $0x10] sm:$0xf] %v689
        %v691 = vld [vmem:[%s669 + $0x14] sm:$0x1]
        %v692 = vsel %vm678, %v610, %v691
        %693 = vst [vmem:[%s669 + $0x14] sm:$0x1] %v692
        %v694 = vld [vmem:[%s669 + $0x18] sm:$0xf]
        %v695 = vsel %vm672, %v617, %v694
        %696 = vst [vmem:[%s669 + $0x18] sm:$0xf] %v695
        %v697 = vld [vmem:[%s669 + $0x1c] sm:$0x1]
        %v698 = vsel %vm678, %v618, %v697
        %699 = vst [vmem:[%s669 + $0x1c] sm:$0x1] %v698
        %v700 = vld [vmem:[%s669 + $0x20] sm:$0xf]
        %v701 = vsel %vm672, %v625, %v700
        %702 = vst [vmem:[%s669 + $0x20] sm:$0xf] %v701
        %v703 = vld [vmem:[%s669 + $0x24] sm:$0x1]
        %v704 = vsel %vm678, %v626, %v703
        %705 = vst [vmem:[%s669 + $0x24] sm:$0x1] %v704
        %v706 = vld [vmem:[%s669 + $0x28] sm:$0xf]
        %v707 = vsel %vm672, %v633, %v706
        %708 = vst [vmem:[%s669 + $0x28] sm:$0xf] %v707
        %v709 = vld [vmem:[%s669 + $0x2c] sm:$0x1]
        %v710 = vsel %vm678, %v634, %v709
        %711 = vst [vmem:[%s669 + $0x2c] sm:$0x1] %v710
        %v712 = vld [vmem:[%s669 + $0x30] sm:$0xf]
        %v713 = vsel %vm672, %v641, %v712
        %714 = vst [vmem:[%s669 + $0x30] sm:$0xf] %v713
        %v715 = vld [vmem:[%s669 + $0x34] sm:$0x1]
        %v716 = vsel %vm678, %v642, %v715
        %717 = vst [vmem:[%s669 + $0x34] sm:$0x1] %v716
        %v718 = vld [vmem:[%s669 + $0x38] sm:$0xf]
        %v719 = vsel %vm672, %v649, %v718
        %720 = vst [vmem:[%s669 + $0x38] sm:$0xf] %v719
        %v721 = vld [vmem:[%s669 + $0x3c] sm:$0x1]
        %v722 = vsel %vm678, %v650, %v721
        %723 = vst [vmem:[%s669 + $0x3c] sm:$0x1] %v722
        %s724 = smul.u32 %s26, 64
        %v725 = vlaneseq
        %v726 = vshrl.u32 %v725, 7
        %v727 = vadd.s32 %v726, 8
        %v728 = vadd.s32 %v726, 16
        %v729 = vadd.s32 %v726, 24
        %v730 = vadd.s32 %v726, 32
        %v731 = vadd.s32 %v726, 40
        %v732 = vadd.s32 %v726, 48
        %v733 = vadd.s32 %v726, 56
        %v734 = vstv %s724
        %v735 = vadd.s32 %v726, %v734
        %v736 = vadd.s32 %v727, %v734
        %v737 = vadd.s32 %v728, %v734
        %v738 = vadd.s32 %v729, %v734
        %v739 = vadd.s32 %v730, %v734
        %v740 = vadd.s32 %v731, %v734
        %v741 = vadd.s32 %v732, %v734
        %v742 = vadd.s32 %v733, %v734
        %v743 = vld [vmem:[#allocation2] sm:$0x1]
        %vm744 = vcmp.lt.s32.totalorder %v735, 64
        %vm745 = vcmp.lt.s32.totalorder %v736, 64
        %vm746 = vcmp.lt.s32.totalorder %v737, 64
        %vm747 = vcmp.lt.s32.totalorder %v738, 64
        %vm748 = vcmp.lt.s32.totalorder %v739, 64
        %vm749 = vcmp.lt.s32.totalorder %v740, 64
        %vm750 = vcmp.lt.s32.totalorder %v741, 64
        %vm751 = vcmp.lt.s32.totalorder %v742, 64
        %v752 = vsel %vm744, 1, 0
        %v753 = vsel %vm745, 1, 0
        %v754 = vsel %vm746, 1, 0
        %v755 = vsel %vm747, 1, 0
        %v756 = vsel %vm748, 1, 0
        %v757 = vsel %vm749, 1, 0
        %v758 = vsel %vm750, 1, 0
        %v759 = vsel %vm751, 1, 0
        %vm760 = vcmp.eq.s32.totalorder %v752, 1
        %vm761 = vcmp.eq.s32.totalorder %v753, 1
        %vm762 = vcmp.eq.s32.totalorder %v754, 1
        %vm763 = vcmp.eq.s32.totalorder %v755, 1
        %vm764 = vcmp.eq.s32.totalorder %v756, 1
        %vm765 = vcmp.eq.s32.totalorder %v757, 1
        %vm766 = vcmp.eq.s32.totalorder %v758, 1
        %vm767 = vcmp.eq.s32.totalorder %v759, 1
        %v768 = vsel %vm760, %v553, 0.0
        %v769 = vsel %vm761, %v554, 0.0
        %v770 = vsel %vm762, %v555, 0.0
        %v771 = vsel %vm763, %v556, 0.0
        %v772 = vsel %vm764, %v557, 0.0
        %v773 = vsel %vm765, %v558, 0.0
        %v774 = vsel %vm766, %v559, 0.0
        %v775 = vsel %vm767, %v560, 0.0
        %v776 = vsel %vm369, %v768, 0.0
        %v777 = vsel %vm369, %v769, 0.0
        %v778 = vadd.f32 %v776, %v777
        %v779 = vsel %vm369, %v770, 0.0
        %v780 = vadd.f32 %v778, %v779
        %v781 = vsel %vm369, %v771, 0.0
        %v782 = vadd.f32 %v780, %v781
        %v783 = vsel %vm369, %v772, 0.0
        %v784 = vadd.f32 %v782, %v783
        %v785 = vsel %vm369, %v773, 0.0
        %v786 = vadd.f32 %v784, %v785
        %v787 = vsel %vm369, %v774, 0.0
        %v788 = vadd.f32 %v786, %v787
        %v789 = vsel %vm369, %v775, 0.0
        %v790 = vadd.f32 %v788, %v789
        %v791 = vrot.slane %v790, 4
        %v792 = vadd.f32 %v790, %v791
        %v793 = vrot.slane %v792, 2
        %v794 = vadd.f32 %v792, %v793
        %v795 = vrot.slane %v794, 1
        %v796 = vadd.f32 %v794, %v795
        %v797 = vadd.f32 %v743, %v796
        %vm798 = vcmask 253952
        %799 = vst.msk [vmem:[#allocation2] sm:$0x1] %vm798, %v797
        // Predicated region
        $region45: #{network_forward.1} parent=39 // pred_check
          %p800 = pneg %p291
        $region46: #{network_forward.1} parent=39 // pred_check_branch
          %802 = sbr.rel (%p800) target = $region48
        $region47: #{network_forward.1} parent=39 // pred_region
          %v803 = vld [vmem:[#allocation2] sm:$0x1]
          %v804 = vmul.f32 %v803, 0.015625
          %v805 = vpack.c.bf16 %v804, %v804
          %v806 = vld [vmem:[%s1] sm:$0xff]
          %v807 = vld [vmem:[%s1 + $0x8] sm:$0xff]
          %v808 = vld [vmem:[%s1 + $0x10] sm:$0xff]
          %v809 = vld [vmem:[%s1 + $0x18] sm:$0xff]
          %v810 = vld [vmem:[%s2] sm:$0x3]
          %v815 = vunpack.c.l.b16 %v806
          %v816 = vunpack.c.h.b16 %v806
          %v817 = vunpack.c.l.b16 %v807
          %v818 = vunpack.c.h.b16 %v807
          %v819 = vunpack.c.l.b16 %v808
          %v820 = vunpack.c.h.b16 %v808
          %v821 = vunpack.c.l.b16 %v809
          %v822 = vunpack.c.h.b16 %v809
          %v823 = vpack.c.b16 %v817, %v815
          %v824 = vpack.c.b16 %v818, %v816
          %v825 = vpack.c.b16 %v821, %v819
          %v826 = vpack.c.b16 %v822, %v820
          %827 = vrot.lane.b32.xlu0 %v823, 64
          %v828 = vpop.permute.xlu0 %827
          %829 = vrot.lane.b32.xlu0 %v824, 64
          %v830 = vpop.permute.xlu0 %829
          %831 = vrot.lane.b32.xlu0 %v825, 64
          %v832 = vpop.permute.xlu0 %831
          %833 = vrot.lane.b32.xlu0 %v826, 64
          %v834 = vpop.permute.xlu0 %833
          %vm835 = vcmask 523264
          %v836 = vsel %vm835, %v828, %v830
          %v837 = vsel %vm835, %v832, %v834
          %v841 = vlaneseq
          %v842 = vshrl.u32 %v841, 7
          %v843 = vsub.s32 0, %v842
          %v844 = vrot.slane %v810, %v843
          %v845 = vlaneseq
          %v846 = vshrl.u32 %v845, 7
          %v847 = vsub.s32 1, %v846
          %v848 = vrot.slane %v810, %v847
          %849 = vrot.lane.b32.xlu0 %v844, 64
          %v850 = vpop.permute.xlu0 %849
          %851 = vrot.lane.b32.xlu0 %v848, 64
          %v852 = vpop.permute.xlu0 %851
          %vm853 = vcmask 523264
          %v854 = vsel %vm853, %v850, %v852
          %v857 = vsel %vm369, %v805, 0
          %859 = vmatprep.subr.bf16.mxu0 0
          %860 = vmatpush1.bf16.msra.mxu0 %v836
          %861 = vmatprep.subr.bf16.mxu0 0
          %862 = vmatpush1.bf16.msra.mxu0 %v837
          %863 = vmatprep.subr.bf16.mxu0 0
          %864 = vmatpush1.bf16.msra.mxu0 0
          %865 = vmatprep.subr.bf16.mxu0 0
          %866 = vmatpush1.bf16.msra.mxu0 0
          %867 = vmatprep.subr.bf16.mxu0 0
          %868 = vmatpush1.bf16.msra.mxu0 0
          %869 = vmatprep.subr.bf16.mxu0 0
          %870 = vmatpush1.bf16.msra.mxu0 0
          %871 = vmatprep.subr.bf16.mxu0 0
          %872 = vmatpush1.bf16.msra.mxu0 0
          %873 = vmatprep.subr.bf16.mxu0 0
          %874 = vmatpush1.bf16.msra.mxu0 0
          %875 = vmatprep.subr.bf16.mxu0 0
          %876 = vmatpush1.bf16.msra.mxu0 0
          %877 = vmatprep.subr.bf16.mxu0 0
          %878 = vmatpush1.bf16.msra.mxu0 0
          %879 = vmatprep.subr.bf16.mxu0 0
          %880 = vmatpush1.bf16.msra.mxu0 0
          %881 = vmatprep.subr.bf16.mxu0 0
          %882 = vmatpush1.bf16.msra.mxu0 0
          %883 = vmatprep.subr.bf16.mxu0 0
          %884 = vmatpush1.bf16.msra.mxu0 0
          %885 = vmatprep.subr.bf16.mxu0 0
          %886 = vmatpush1.bf16.msra.mxu0 0
          %887 = vmatprep.subr.bf16.mxu0 0
          %888 = vmatpush1.bf16.msra.mxu0 0
          %889 = vmatprep.subr.bf16.mxu0 0
          %890 = vmatpush1.bf16.msra.mxu0 0
          %891 = vmatprep.mubr.bf16.mxu0 0
          %892 = vmatmul.mubr.bf16.gmra.mrb[0].mxu0 %v857
          %v893 = vpop.f32.mrb[0].mxu0
          %v894 = vadd.f32 %v854, %v893
          %v895 = vpop.f32.mrb[0].mxu0
          %v896 = vpop.f32.mrb[0].mxu0
          %v897 = vpop.f32.mrb[0].mxu0
          %898 = vdwg.mxu0
          %899 = vst [vmem:[%s274] sm:$0x1] %v894
          %v900 = vld [vmem:[#allocation3] sm:$0xf]
          %v901 = vld [vmem:[#allocation3 + $0x4] sm:$0x1]
          %v902 = vld [vmem:[#allocation3 + $0x8] sm:$0xf]
          %v903 = vld [vmem:[#allocation3 + $0xc] sm:$0x1]
          %v904 = vld [vmem:[#allocation3 + $0x10] sm:$0xf]
          %v905 = vld [vmem:[#allocation3 + $0x14] sm:$0x1]
          %v906 = vld [vmem:[#allocation3 + $0x18] sm:$0xf]
          %v907 = vld [vmem:[#allocation3 + $0x1c] sm:$0x1]
          %v908 = vld [vmem:[#allocation3 + $0x20] sm:$0xf]
          %v909 = vld [vmem:[#allocation3 + $0x24] sm:$0x1]
          %v910 = vld [vmem:[#allocation3 + $0x28] sm:$0xf]
          %v911 = vld [vmem:[#allocation3 + $0x2c] sm:$0x1]
          %v912 = vld [vmem:[#allocation3 + $0x30] sm:$0xf]
          %v913 = vld [vmem:[#allocation3 + $0x34] sm:$0x1]
          %v914 = vld [vmem:[#allocation3 + $0x38] sm:$0xf]
          %v915 = vld [vmem:[#allocation3 + $0x3c] sm:$0x1]
          %v916 = vld [vmem:[#allocation3 + $0x40] sm:$0xf]
          %v917 = vld [vmem:[#allocation3 + $0x44] sm:$0x1]
          %v918 = vld [vmem:[#allocation3 + $0x48] sm:$0xf]
          %v919 = vld [vmem:[#allocation3 + $0x4c] sm:$0x1]
          %vm920 = vsmask.f32 3328
          %vm921 = vsmask.f32 7440
          %vm922 = vmor %vm920, %vm921
          %v924 = vshrl.u32 %v900, 16
          %v926 = vrot.slane %v924, 4
          %v927 = vshll.u32 %v900, 16
          %v929 = vrot.slane %v927, 5
          %v930 = vor.u32 %v926, %v929
          %v931 = vrot.slane %v930, 4
          %v933 = vshll.u32 %v901, 16
          %v935 = vrot.slane %v933, 5
          %v936 = vsel %vm922, %v931, %v935
          %v938 = vshrl.u32 %v902, 16
          %v940 = vrot.slane %v938, 4
          %v941 = vshll.u32 %v902, 16
          %v943 = vrot.slane %v941, 5
          %v944 = vor.u32 %v940, %v943
          %v945 = vrot.slane %v944, 4
          %v947 = vshll.u32 %v903, 16
          %v949 = vrot.slane %v947, 5
          %v950 = vsel %vm922, %v945, %v949
          %v952 = vshrl.u32 %v904, 16
          %v954 = vrot.slane %v952, 4
          %v955 = vshll.u32 %v904, 16
          %v957 = vrot.slane %v955, 5
          %v958 = vor.u32 %v954, %v957
          %v959 = vrot.slane %v958, 4
          %v961 = vshll.u32 %v905, 16
          %v963 = vrot.slane %v961, 5
          %v964 = vsel %vm922, %v959, %v963
          %v966 = vshrl.u32 %v906, 16
          %v968 = vrot.slane %v966, 4
          %v969 = vshll.u32 %v906, 16
          %v971 = vrot.slane %v969, 5
          %v972 = vor.u32 %v968, %v971
          %v973 = vrot.slane %v972, 4
          %v975 = vshll.u32 %v907, 16
          %v977 = vrot.slane %v975, 5
          %v978 = vsel %vm922, %v973, %v977
          %v980 = vshrl.u32 %v908, 16
          %v982 = vrot.slane %v980, 4
          %v983 = vshll.u32 %v908, 16
          %v985 = vrot.slane %v983, 5
          %v986 = vor.u32 %v982, %v985
          %v987 = vrot.slane %v986, 4
          %v989 = vshll.u32 %v909, 16
          %v991 = vrot.slane %v989, 5
          %v992 = vsel %vm922, %v987, %v991
          %v994 = vshrl.u32 %v910, 16
          %v996 = vrot.slane %v994, 4
          %v997 = vshll.u32 %v910, 16
          %v999 = vrot.slane %v997, 5
          %v1000 = vor.u32 %v996, %v999
          %v1001 = vrot.slane %v1000, 4
          %v1003 = vshll.u32 %v911, 16
          %v1005 = vrot.slane %v1003, 5
          %v1006 = vsel %vm922, %v1001, %v1005
          %v1008 = vshrl.u32 %v912, 16
          %v1010 = vrot.slane %v1008, 4
          %v1011 = vshll.u32 %v912, 16
          %v1013 = vrot.slane %v1011, 5
          %v1014 = vor.u32 %v1010, %v1013
          %v1015 = vrot.slane %v1014, 4
          %v1017 = vshll.u32 %v913, 16
          %v1019 = vrot.slane %v1017, 5
          %v1020 = vsel %vm922, %v1015, %v1019
          %v1022 = vshrl.u32 %v914, 16
          %v1024 = vrot.slane %v1022, 4
          %v1025 = vshll.u32 %v914, 16
          %v1027 = vrot.slane %v1025, 5
          %v1028 = vor.u32 %v1024, %v1027
          %v1029 = vrot.slane %v1028, 4
          %v1031 = vshll.u32 %v915, 16
          %v1033 = vrot.slane %v1031, 5
          %v1034 = vsel %vm922, %v1029, %v1033
          %vm1051 = vcmask 1042432
          %vm1052 = vcmask 1046532
          %vm1053 = vmor %vm1051, %vm1052
          %v1054 = vrot.slane %v900, 5
          %v1055 = vrot.slane %v1054, 4
          %v1056 = vrot.slane %v901, 5
          %v1057 = vsel %vm1053, %v1055, %v1056
          %v1058 = vrot.slane %v902, 5
          %v1059 = vrot.slane %v1058, 4
          %v1060 = vrot.slane %v903, 5
          %v1061 = vsel %vm1053, %v1059, %v1060
          %v1062 = vrot.slane %v904, 5
          %v1063 = vrot.slane %v1062, 4
          %v1064 = vrot.slane %v905, 5
          %v1065 = vsel %vm1053, %v1063, %v1064
          %v1066 = vrot.slane %v906, 5
          %v1067 = vrot.slane %v1066, 4
          %v1068 = vrot.slane %v907, 5
          %v1069 = vsel %vm1053, %v1067, %v1068
          %v1070 = vrot.slane %v908, 5
          %v1071 = vrot.slane %v1070, 4
          %v1072 = vrot.slane %v909, 5
          %v1073 = vsel %vm1053, %v1071, %v1072
          %v1074 = vrot.slane %v910, 5
          %v1075 = vrot.slane %v1074, 4
          %v1076 = vrot.slane %v911, 5
          %v1077 = vsel %vm1053, %v1075, %v1076
          %v1078 = vrot.slane %v912, 5
          %v1079 = vrot.slane %v1078, 4
          %v1080 = vrot.slane %v913, 5
          %v1081 = vsel %vm1053, %v1079, %v1080
          %v1082 = vrot.slane %v914, 5
          %v1083 = vrot.slane %v1082, 4
          %v1084 = vrot.slane %v915, 5
          %v1085 = vsel %vm1053, %v1083, %v1084
          %v1087 = vshrl.u32 %v916, 16
          %v1089 = vrot.slane %v1087, 4
          %v1090 = vshll.u32 %v916, 16
          %v1092 = vrot.slane %v1090, 5
          %v1093 = vor.u32 %v1089, %v1092
          %v1094 = vrot.slane %v1093, 4
          %v1096 = vshll.u32 %v917, 16
          %v1098 = vrot.slane %v1096, 5
          %v1099 = vsel %vm922, %v1094, %v1098
          %v1102 = vrot.slane %v916, 5
          %v1103 = vrot.slane %v1102, 4
          %v1104 = vrot.slane %v917, 5
          %v1105 = vsel %vm1053, %v1103, %v1104
          %v1107 = vshrl.u32 %v918, 16
          %v1109 = vrot.slane %v1107, 4
          %v1110 = vshll.u32 %v918, 16
          %v1112 = vrot.slane %v1110, 5
          %v1113 = vor.u32 %v1109, %v1112
          %v1114 = vrot.slane %v1113, 4
          %v1116 = vshll.u32 %v919, 16
          %v1118 = vrot.slane %v1116, 5
          %v1119 = vsel %vm922, %v1114, %v1118
          %v1122 = vrot.slane %v918, 5
          %v1123 = vrot.slane %v1122, 4
          %v1124 = vrot.slane %v919, 5
          %v1125 = vsel %vm1053, %v1123, %v1124
          %v1126 = vunpack.c.l.b16 %v900
          %v1127 = vunpack.c.l.b16 %v902
          %v1128 = vunpack.c.l.b16 %v904
          %v1129 = vunpack.c.l.b16 %v906
          %v1130 = vunpack.c.l.b16 %v908
          %v1131 = vunpack.c.l.b16 %v910
          %v1132 = vunpack.c.l.b16 %v912
          %v1133 = vunpack.c.l.b16 %v914
          %v1134 = vpack.c.b16 %v1127, %v1126
          %v1135 = vpack.c.b16 %v1129, %v1128
          %v1136 = vpack.c.b16 %v1131, %v1130
          %v1137 = vpack.c.b16 %v1133, %v1132
          %v1138 = vunpack.c.l.b16 %v936
          %v1139 = vunpack.c.l.b16 %v950
          %v1140 = vunpack.c.l.b16 %v964
          %v1141 = vunpack.c.l.b16 %v978
          %v1142 = vunpack.c.l.b16 %v992
          %v1143 = vunpack.c.l.b16 %v1006
          %v1144 = vunpack.c.l.b16 %v1020
          %v1145 = vunpack.c.l.b16 %v1034
          %v1146 = vpack.c.b16 %v1139, %v1138
          %v1147 = vpack.c.b16 %v1141, %v1140
          %v1148 = vpack.c.b16 %v1143, %v1142
          %v1149 = vpack.c.b16 %v1145, %v1144
          %1150 = vrot.lane.b32.xlu0 %v1146, 32
          %v1151 = vpop.permute.xlu0 %1150
          %1152 = vrot.lane.b32.xlu0 %v1147, 32
          %v1153 = vpop.permute.xlu0 %1152
          %1154 = vrot.lane.b32.xlu0 %v1148, 32
          %v1155 = vpop.permute.xlu0 %1154
          %1156 = vrot.lane.b32.xlu0 %v1149, 32
          %v1157 = vpop.permute.xlu0 %1156
          %v1158 = vunpack.c.l.b16 %v1057
          %v1159 = vunpack.c.l.b16 %v1061
          %v1160 = vunpack.c.l.b16 %v1065
          %v1161 = vunpack.c.l.b16 %v1069
          %v1162 = vunpack.c.l.b16 %v1073
          %v1163 = vunpack.c.l.b16 %v1077
          %v1164 = vunpack.c.l.b16 %v1081
          %v1165 = vunpack.c.l.b16 %v1085
          %v1166 = vpack.c.b16 %v1159, %v1158
          %v1167 = vpack.c.b16 %v1161, %v1160
          %v1168 = vpack.c.b16 %v1163, %v1162
          %v1169 = vpack.c.b16 %v1165, %v1164
          %1170 = vrot.lane.b32.xlu0 %v1166, 64
          %v1171 = vpop.permute.xlu0 %1170
          %1172 = vrot.lane.b32.xlu0 %v1167, 64
          %v1173 = vpop.permute.xlu0 %1172
          %1174 = vrot.lane.b32.xlu0 %v1168, 64
          %v1175 = vpop.permute.xlu0 %1174
          %1176 = vrot.lane.b32.xlu0 %v1169, 64
          %v1177 = vpop.permute.xlu0 %1176
          %v1178 = vunpack.c.l.b16 %v916
          %v1179 = vpack.c.b16 %v1128, %v1127
          %v1180 = vpack.c.b16 %v1130, %v1129
          %v1181 = vpack.c.b16 %v1132, %v1131
          %v1182 = vpack.c.b16 %v1178, %v1133
          %1183 = vrot.lane.b32.xlu0 %v1179, 96
          %v1184 = vpop.permute.xlu0 %1183
          %1185 = vrot.lane.b32.xlu0 %v1180, 96
          %v1186 = vpop.permute.xlu0 %1185
          %1187 = vrot.lane.b32.xlu0 %v1181, 96
          %v1188 = vpop.permute.xlu0 %1187
          %1189 = vrot.lane.b32.xlu0 %v1182, 96
          %v1190 = vpop.permute.xlu0 %1189
          %v1191 = vunpack.c.l.b16 %v1099
          %v1192 = vpack.c.b16 %v1140, %v1139
          %v1193 = vpack.c.b16 %v1142, %v1141
          %v1194 = vpack.c.b16 %v1144, %v1143
          %v1195 = vpack.c.b16 %v1191, %v1145
          %v1196 = vunpack.c.l.b16 %v1105
          %v1197 = vpack.c.b16 %v1160, %v1159
          %v1198 = vpack.c.b16 %v1162, %v1161
          %v1199 = vpack.c.b16 %v1164, %v1163
          %v1200 = vpack.c.b16 %v1196, %v1165
          %1201 = vrot.lane.b32.xlu0 %v1197, 32
          %v1202 = vpop.permute.xlu0 %1201
          %1203 = vrot.lane.b32.xlu0 %v1198, 32
          %v1204 = vpop.permute.xlu0 %1203
          %1205 = vrot.lane.b32.xlu0 %v1199, 32
          %v1206 = vpop.permute.xlu0 %1205
          %1207 = vrot.lane.b32.xlu0 %v1200, 32
          %v1208 = vpop.permute.xlu0 %1207
          %v1209 = vunpack.c.l.b16 %v918
          %v1210 = vpack.c.b16 %v1209, %v1178
          %1211 = vrot.lane.b32.xlu0 %v1135, 64
          %v1212 = vpop.permute.xlu0 %1211
          %1213 = vrot.lane.b32.xlu0 %v1136, 64
          %v1214 = vpop.permute.xlu0 %1213
          %1215 = vrot.lane.b32.xlu0 %v1137, 64
          %v1216 = vpop.permute.xlu0 %1215
          %1217 = vrot.lane.b32.xlu0 %v1210, 64
          %v1218 = vpop.permute.xlu0 %1217
          %v1219 = vunpack.c.l.b16 %v1119
          %v1220 = vpack.c.b16 %v1219, %v1191
          %1221 = vrot.lane.b32.xlu0 %v1147, 96
          %v1222 = vpop.permute.xlu0 %1221
          %1223 = vrot.lane.b32.xlu0 %v1148, 96
          %v1224 = vpop.permute.xlu0 %1223
          %1225 = vrot.lane.b32.xlu0 %v1149, 96
          %v1226 = vpop.permute.xlu0 %1225
          %1227 = vrot.lane.b32.xlu0 %v1220, 96
          %v1228 = vpop.permute.xlu0 %1227
          %v1229 = vunpack.c.l.b16 %v1125
          %v1230 = vpack.c.b16 %v1229, %v1196
          %v1233 = vsel %vm369, %v1134, %v1151
          %v1236 = vsel %vm369, %v1135, %v1153
          %v1239 = vsel %vm369, %v1136, %v1155
          %v1242 = vsel %vm369, %v1137, %v1157
          %v1244 = vsel %vm853, %v1233, %v1171
          %v1246 = vsel %vm853, %v1236, %v1173
          %v1248 = vsel %vm853, %v1239, %v1175
          %v1250 = vsel %vm853, %v1242, %v1177
          %vm1251 = vcmask 785408
          %v1253 = vsel %vm1251, %v1244, %v1184
          %v1256 = vsel %vm1251, %v1246, %v1186
          %v1259 = vsel %vm1251, %v1248, %v1188
          %v1262 = vsel %vm1251, %v1250, %v1190
          %v1266 = vsel %vm369, %v1192, %v1202
          %v1269 = vsel %vm369, %v1193, %v1204
          %v1272 = vsel %vm369, %v1194, %v1206
          %v1275 = vsel %vm369, %v1195, %v1208
          %v1277 = vsel %vm853, %v1266, %v1212
          %v1279 = vsel %vm853, %v1269, %v1214
          %v1281 = vsel %vm853, %v1272, %v1216
          %v1283 = vsel %vm853, %v1275, %v1218
          %v1285 = vsel %vm1251, %v1277, %v1222
          %v1288 = vsel %vm1251, %v1279, %v1224
          %v1291 = vsel %vm1251, %v1281, %v1226
          %v1294 = vsel %vm1251, %v1283, %v1228
          %v1296 = vld [vmem:[%s3] sm:$0xf]
          %v1297 = vld [vmem:[%s3 + $0x4] sm:$0xf]
          %v1298 = vld [vmem:[%s3 + $0x8] sm:$0xf]
          %v1299 = vld [vmem:[%s3 + $0xc] sm:$0xf]
          %v1300 = vld [vmem:[%s3 + $0x10] sm:$0xf]
          %v1301 = vld [vmem:[%s3 + $0x14] sm:$0xf]
          %v1302 = vld [vmem:[%s3 + $0x18] sm:$0xf]
          %v1303 = vld [vmem:[%s3 + $0x1c] sm:$0xf]
          %v1304 = vld [vmem:[%s3 + $0x20] sm:$0xf]
          %v1305 = vld [vmem:[%s3 + $0x24] sm:$0xf]
          %v1306 = vld [vmem:[%s3 + $0x28] sm:$0xf]
          %v1307 = vld [vmem:[%s3 + $0x2c] sm:$0xf]
          %v1308 = vld [vmem:[%s3 + $0x30] sm:$0xf]
          %v1309 = vld [vmem:[%s3 + $0x34] sm:$0xf]
          %v1310 = vld [vmem:[%s3 + $0x38] sm:$0xf]
          %v1311 = vld [vmem:[%s3 + $0x3c] sm:$0xf]
          %v1312 = vld [vmem:[%s3 + $0x40] sm:$0xf]
          %v1313 = vld [vmem:[%s3 + $0x44] sm:$0xf]
          %v1314 = vld [vmem:[%s3 + $0x48] sm:$0xf]
          %v1315 = vld [vmem:[%s3 + $0x4c] sm:$0xf]
          %v1316 = vld [vmem:[%s3 + $0x50] sm:$0xf]
          %v1317 = vld [vmem:[%s3 + $0x54] sm:$0xf]
          %v1318 = vld [vmem:[%s3 + $0x58] sm:$0xf]
          %v1319 = vld [vmem:[%s3 + $0x5c] sm:$0xf]
          %v1320 = vld [vmem:[%s3 + $0x60] sm:$0xf]
          %v1321 = vld [vmem:[%s3 + $0x64] sm:$0xf]
          %v1322 = vld [vmem:[%s3 + $0x68] sm:$0xf]
          %v1323 = vld [vmem:[%s3 + $0x6c] sm:$0xf]
          %v1324 = vld [vmem:[%s3 + $0x70] sm:$0xf]
          %v1325 = vld [vmem:[%s3 + $0x74] sm:$0xf]
          %v1326 = vld [vmem:[%s3 + $0x78] sm:$0xf]
          %v1327 = vld [vmem:[%s3 + $0x7c] sm:$0xf]
          %v1328 = vld [vmem:[%s3 + $0x80] sm:$0xf]
          %v1329 = vld [vmem:[%s3 + $0x84] sm:$0xf]
          %v1330 = vld [vmem:[%s3 + $0x88] sm:$0xf]
          %v1331 = vld [vmem:[%s3 + $0x8c] sm:$0xf]
          %v1332 = vld [vmem:[%s4] sm:$0x1]
          %v1334 = vlaneseq
          %v1335 = vshrl.u32 %v1334, 7
          %v1336 = vsub.s32 0, %v1335
          %v1337 = vrot.slane %v1332, %v1336
          %v1375 = vunpack.c.l.b16 %v1296
          %v1376 = vunpack.c.l.b16 %v1297
          %v1377 = vunpack.c.l.b16 %v1298
          %v1378 = vunpack.c.l.b16 %v1299
          %v1379 = vunpack.c.l.b16 %v1300
          %v1380 = vunpack.c.l.b16 %v1301
          %v1381 = vunpack.c.l.b16 %v1302
          %v1382 = vunpack.c.l.b16 %v1303
          %v1383 = vunpack.c.l.b16 %v1304
          %v1384 = vunpack.c.l.b16 %v1305
          %v1385 = vunpack.c.l.b16 %v1306
          %v1386 = vunpack.c.l.b16 %v1307
          %v1387 = vunpack.c.l.b16 %v1308
          %v1388 = vunpack.c.l.b16 %v1309
          %v1389 = vunpack.c.l.b16 %v1310
          %v1390 = vunpack.c.l.b16 %v1311
          %v1391 = vunpack.c.l.b16 %v1312
          %v1392 = vunpack.c.l.b16 %v1313
          %v1393 = vunpack.c.l.b16 %v1314
          %v1394 = vunpack.c.l.b16 %v1315
          %v1395 = vunpack.c.l.b16 %v1316
          %v1396 = vunpack.c.l.b16 %v1317
          %v1397 = vunpack.c.l.b16 %v1318
          %v1398 = vunpack.c.l.b16 %v1319
          %v1399 = vunpack.c.l.b16 %v1320
          %v1400 = vunpack.c.l.b16 %v1321
          %v1401 = vunpack.c.l.b16 %v1322
          %v1402 = vunpack.c.l.b16 %v1323
          %v1403 = vunpack.c.l.b16 %v1324
          %v1404 = vunpack.c.l.b16 %v1325
          %v1405 = vunpack.c.l.b16 %v1326
          %v1406 = vunpack.c.l.b16 %v1327
          %v1407 = vunpack.c.l.b16 %v1328
          %v1408 = vunpack.c.l.b16 %v1329
          %v1409 = vunpack.c.l.b16 %v1330
          %v1410 = vunpack.c.l.b16 %v1331
          %v1411 = vpack.c.b16 %v1376, %v1375
          %v1412 = vpack.c.b16 %v1378, %v1377
          %v1413 = vpack.c.b16 %v1380, %v1379
          %v1414 = vpack.c.b16 %v1382, %v1381
          %v1415 = vpack.c.b16 %v1384, %v1383
          %v1416 = vpack.c.b16 %v1386, %v1385
          %v1417 = vpack.c.b16 %v1388, %v1387
          %v1418 = vpack.c.b16 %v1390, %v1389
          %v1419 = vpack.c.b16 %v1392, %v1391
          %v1420 = vpack.c.b16 %v1394, %v1393
          %v1421 = vpack.c.b16 %v1396, %v1395
          %v1422 = vpack.c.b16 %v1398, %v1397
          %v1423 = vpack.c.b16 %v1400, %v1399
          %v1424 = vpack.c.b16 %v1402, %v1401
          %v1425 = vpack.c.b16 %v1404, %v1403
          %v1426 = vpack.c.b16 %v1406, %v1405
          %v1427 = vpack.c.b16 %v1408, %v1407
          %v1428 = vpack.c.b16 %v1410, %v1409
          %v1448 = vsel %vm369, %v1167, 0
          %v1451 = vsel %vm369, %v1168, 0
          %v1454 = vsel %vm369, %v1169, 0
          %v1457 = vsel %vm369, %v1230, 0
          %1459 = vmatprep.subr.bf16.mxu0 0
          %1460 = vmatpush1.bf16.msra.mxu0 %v1411
          %1461 = vmatprep.subr.bf16.mxu0 0
          %1462 = vmatpush1.bf16.msra.mxu0 %v1412
          %1463 = vmatprep.subr.bf16.mxu0 0
          %1464 = vmatpush1.bf16.msra.mxu0 %v1413
          %1465 = vmatprep.subr.bf16.mxu0 0
          %1466 = vmatpush1.bf16.msra.mxu0 %v1414
          %1467 = vmatprep.subr.bf16.mxu0 0
          %1468 = vmatpush1.bf16.msra.mxu0 %v1415
          %1469 = vmatprep.subr.bf16.mxu0 0
          %1470 = vmatpush1.bf16.msra.mxu0 %v1416
          %1471 = vmatprep.subr.bf16.mxu0 0
          %1472 = vmatpush1.bf16.msra.mxu0 %v1417
          %1473 = vmatprep.subr.bf16.mxu0 0
          %1474 = vmatpush1.bf16.msra.mxu0 %v1418
          %1475 = vmatprep.subr.bf16.mxu0 0
          %1476 = vmatpush1.bf16.msra.mxu0 %v1419
          %1477 = vmatprep.subr.bf16.mxu0 0
          %1478 = vmatpush1.bf16.msra.mxu0 %v1420
          %1479 = vmatprep.subr.bf16.mxu0 0
          %1480 = vmatpush1.bf16.msra.mxu0 %v1421
          %1481 = vmatprep.subr.bf16.mxu0 0
          %1482 = vmatpush1.bf16.msra.mxu0 %v1422
          %1483 = vmatprep.subr.bf16.mxu0 0
          %1484 = vmatpush1.bf16.msra.mxu0 %v1423
          %1485 = vmatprep.subr.bf16.mxu0 0
          %1486 = vmatpush1.bf16.msra.mxu0 %v1424
          %1487 = vmatprep.subr.bf16.mxu0 0
          %1488 = vmatpush1.bf16.msra.mxu0 %v1425
          %1489 = vmatprep.subr.bf16.mxu0 0
          %1490 = vmatpush1.bf16.msra.mxu0 %v1426
          %1491 = vmatprep.mubr.bf16.mxu0 %v1285
          %1492 = vmatmul.mubr.bf16.gmra.mrb[0].mxu0 %v1253
          %v1493 = vpop.f32.mrb[0].mxu0
          %v1494 = vadd.f32 %v1337, %v1493
          %v1495 = vpop.f32.mrb[0].mxu0
          %v1496 = vpop.f32.mrb[0].mxu0
          %v1497 = vadd.f32 %v1337, %v1496
          %v1498 = vpop.f32.mrb[0].mxu0
          %1499 = vmatprep.mubr.bf16.mxu0 %v1288
          %1500 = vmatmul.mubr.bf16.gmra.mrb[0].mxu0 %v1256
          %v1501 = vpop.f32.mrb[0].mxu0
          %v1502 = vadd.f32 %v1337, %v1501
          %v1503 = vpop.f32.mrb[0].mxu0
          %v1504 = vpop.f32.mrb[0].mxu0
          %v1505 = vadd.f32 %v1337, %v1504
          %v1506 = vpop.f32.mrb[0].mxu0
          %1507 = vmatprep.mubr.bf16.mxu0 %v1291
          %1508 = vmatmul.mubr.bf16.gmra.mrb[0].mxu0 %v1259
          %v1509 = vpop.f32.mrb[0].mxu0
          %v1510 = vadd.f32 %v1337, %v1509
          %v1511 = vpop.f32.mrb[0].mxu0
          %v1512 = vpop.f32.mrb[0].mxu0
          %v1513 = vadd.f32 %v1337, %v1512
          %v1514 = vpop.f32.mrb[0].mxu0
          %1515 = vmatprep.mubr.bf16.mxu0 %v1294
          %1516 = vmatmul.mubr.bf16.gmra.mrb[0].mxu0 %v1262
          %v1517 = vpop.f32.mrb[0].mxu0
          %v1518 = vadd.f32 %v1337, %v1517
          %v1519 = vpop.f32.mrb[0].mxu0
          %v1520 = vpop.f32.mrb[0].mxu0
          %v1521 = vadd.f32 %v1337, %v1520
          %v1522 = vpop.f32.mrb[0].mxu0
          %1523 = vdwg.mxu0
          %1524 = vmatprep.subr.bf16.mxu0 0
          %1525 = vmatpush1.bf16.msra.mxu0 %v1427
          %1526 = vmatprep.subr.bf16.mxu0 0
          %1527 = vmatpush1.bf16.msra.mxu0 %v1428
          %1528 = vmatprep.subr.bf16.mxu0 0
          %1529 = vmatpush1.bf16.msra.mxu0 0
          %1530 = vmatprep.subr.bf16.mxu0 0
          %1531 = vmatpush1.bf16.msra.mxu0 0
          %1532 = vmatprep.subr.bf16.mxu0 0
          %1533 = vmatpush1.bf16.msra.mxu0 0
          %1534 = vmatprep.subr.bf16.mxu0 0
          %1535 = vmatpush1.bf16.msra.mxu0 0
          %1536 = vmatprep.subr.bf16.mxu0 0
          %1537 = vmatpush1.bf16.msra.mxu0 0
          %1538 = vmatprep.subr.bf16.mxu0 0
          %1539 = vmatpush1.bf16.msra.mxu0 0
          %1540 = vmatprep.subr.bf16.mxu0 0
          %1541 = vmatpush1.bf16.msra.mxu0 0
          %1542 = vmatprep.subr.bf16.mxu0 0
          %1543 = vmatpush1.bf16.msra.mxu0 0
          %1544 = vmatprep.subr.bf16.mxu0 0
          %1545 = vmatpush1.bf16.msra.mxu0 0
          %1546 = vmatprep.subr.bf16.mxu0 0
          %1547 = vmatpush1.bf16.msra.mxu0 0
          %1548 = vmatprep.subr.bf16.mxu0 0
          %1549 = vmatpush1.bf16.msra.mxu0 0
          %1550 = vmatprep.subr.bf16.mxu0 0
          %1551 = vmatpush1.bf16.msra.mxu0 0
          %1552 = vmatprep.subr.bf16.mxu0 0
          %1553 = vmatpush1.bf16.msra.mxu0 0
          %1554 = vmatprep.subr.bf16.mxu0 0
          %1555 = vmatpush1.bf16.msra.mxu0 0
          %1556 = vmatprep.mubr.bf16.mxu0 0
          %1557 = vmatmul.mubr.bf16.gmra.mrb[0].mxu0 %v1448
          %v1558 = vpop.f32.mrb[0].mxu0
          %v1559 = vadd.f32 %v1494, %v1558
          %v1560 = vpop.f32.mrb[0].mxu0
          %v1561 = vpop.f32.mrb[0].mxu0
          %v1562 = vadd.f32 %v1497, %v1561
          %v1563 = vpop.f32.mrb[0].mxu0
          %1564 = vmatprep.mubr.bf16.mxu0 0
          %1565 = vmatmul.mubr.bf16.gmra.mrb[0].mxu0 %v1451
          %v1566 = vpop.f32.mrb[0].mxu0
          %v1567 = vadd.f32 %v1502, %v1566
          %v1568 = vpop.f32.mrb[0].mxu0
          %v1569 = vpop.f32.mrb[0].mxu0
          %v1570 = vadd.f32 %v1505, %v1569
          %v1571 = vpop.f32.mrb[0].mxu0
          %1572 = vmatprep.mubr.bf16.mxu0 0
          %1573 = vmatmul.mubr.bf16.gmra.mrb[0].mxu0 %v1454
          %v1574 = vpop.f32.mrb[0].mxu0
          %v1575 = vadd.f32 %v1510, %v1574
          %v1576 = vpop.f32.mrb[0].mxu0
          %v1577 = vpop.f32.mrb[0].mxu0
          %v1578 = vadd.f32 %v1513, %v1577
          %v1579 = vpop.f32.mrb[0].mxu0
          %1580 = vmatprep.mubr.bf16.mxu0 0
          %1581 = vmatmul.mubr.bf16.gmra.mrb[0].mxu0 %v1457
          %v1582 = vpop.f32.mrb[0].mxu0
          %v1583 = vadd.f32 %v1518, %v1582
          %v1584 = vpop.f32.mrb[0].mxu0
          %v1585 = vpop.f32.mrb[0].mxu0
          %v1586 = vadd.f32 %v1521, %v1585
          %v1587 = vpop.f32.mrb[0].mxu0
          %1588 = vdwg.mxu0
          %1589 = vst [vmem:[%s289] sm:$0xff] %v1559
          %1590 = vst [vmem:[%s289 + $0x8] sm:$0xff] %v1562
          %1591 = vst [vmem:[%s289 + $0x10] sm:$0xff] %v1567
          %1592 = vst [vmem:[%s289 + $0x18] sm:$0xff] %v1570
          %1593 = vst [vmem:[%s289 + $0x20] sm:$0xff] %v1575
          %1594 = vst [vmem:[%s289 + $0x28] sm:$0xff] %v1578
          %1595 = vst [vmem:[%s289 + $0x30] sm:$0xff] %v1583
          %1596 = vst [vmem:[%s289 + $0x38] sm:$0xff] %v1586
        $region48: #{network_forward.1} parent=39 // pred_fallthru
          _
        %p1597 = scmp.lt.s32.totalorder %s25, 1
        %s1598 = scalar_select %p1597, %s25, 1
        %s1599 = smul.addr %s1598, 8
        %s1600 = smul.addr %s1599, 8
        %s1601 = scalar_lea.vmem %s5, %s1600
        %s1602 = sand.u32 %s179, 1
        %s1603 = scalar_lea.sflag [#allocation5], %s1602
        %s1604 = sand.u32 %s179, 1
        %s1605 = scalar_lea.vmem [#allocation4], %s1604
        // Predicated region
        $region49: #{network_forward.1} parent=39 // pred_check
          %p1606 = pneg %p163
        $region50: #{network_forward.1} parent=39 // pred_check_branch
          %1608 = sbr.rel (%p1606) target = $region52
        $region51: #{network_forward.1} parent=39 // pred_region
          _
        $region52: #{network_forward.1} parent=39 // pred_fallthru
          _
        // Predicated region
        $region53: #{network_forward.1} parent=39 // pred_check
          %p1609 = pneg %p189
        $region54: #{network_forward.1} parent=39 // pred_check_branch
          %1611 = sbr.rel (%p1609) target = $region56
        $region55: #{network_forward.1} parent=39 // pred_region
          %s1613 = ssub.s32 16, 16
          %1614 = vsyncadd %s1603, %s1613
          %s1615 = smul.addr %s25, 16
          %s1616 = scalar_lea.hbm %s6, %s1615
          %s1618 = sshll.u32 %s1605, 4
          %s1619 = int_to_ptr.vmem [resolvable:$true] %s1618
          %1621 = dma.vmem_to_hbm [thread:$0]  %s1619, 16, %s1616, %s1603
        $region56: #{network_forward.1} parent=39 // pred_fallthru
          _
      $region40: #{network_forward.1} parent=5 // pred_fallthru
        _
      %p1622 = scmp.le.s32.totalorder 2, %s16
      // Predicated region
      $region57: #{network_forward.1} parent=5 // pred_check
        %p1623 = pneg %p1622
      $region58: #{network_forward.1} parent=5 // pred_check_branch
        %1625 = sbr.rel (%p1623) target = $region60
      $region59: #{network_forward.1} parent=5 // pred_region
        %s1626 = ssub.s32 %s16, 2
        // Predicated region
        $region61: #{network_forward.1} parent=59 // pred_check
          %p1627 = pneg %p169
        $region62: #{network_forward.1} parent=59 // pred_check_branch
          %1629 = sbr.rel (%p1627) target = $region64
        $region63: #{network_forward.1} parent=59 // pred_region
          %p1630 = scmp.lt.s32.totalorder %s27, 1
          %s1631 = scalar_select %p1630, %s27, 1
          %s1632 = smul.addr %s1631, 8
          %s1633 = smul.addr %s1632, 8
          %s1634 = scalar_lea.vmem %s5, %s1633
        $region64: #{network_forward.1} parent=59 // pred_fallthru
          _
        // Predicated region
        $region65: #{network_forward.1} parent=59 // pred_check
          %p1635 = pneg %p195
        $region66: #{network_forward.1} parent=59 // pred_check_branch
          %1637 = sbr.rel (%p1635) target = $region68
        $region67: #{network_forward.1} parent=59 // pred_region
          %s1638 = sand.u32 %s180, 1
          %s1639 = scalar_lea.sflag [#allocation5], %s1638
          %s1640 = sand.u32 %s180, 1
          %s1641 = scalar_lea.vmem [#allocation4], %s1640
          %1642 = dma.done %s1639, 16
        $region68: #{network_forward.1} parent=59 // pred_fallthru
          _
      $region60: #{network_forward.1} parent=5 // pred_fallthru
        _
    $region6: #{network_forward.1} parent=1 // loop_footer
      %s20 = sadd.s32 1, %s16
    $region7: #{network_forward.1} parent=1 // loop_footer_branch
      %15 = sbr.rel target = $region3
    $region8: #{network_forward.1} parent=1 // loop_exit
      _
    %1643 = vsyncpa [#allocation5], 1
    %s1644 = scalar_lea.sflag [#allocation5], 1
    %1645 = vsyncpa %s1644, 1

</llo_original>
